<compile_context>
chip_gen: v7x
topology: tpu7x:2x2x1
jax: 0.10.0
libtpu: 0.0.40
codegen_flags: <defaults>
</compile_context>

<pallas_src>
import jax
import jax.numpy as jnp
from jax.experimental import pallas as pl
from jax.experimental.pallas import tpu as pltpu


# ----------------------------------------------------------------------------- kernel
def _make_block_kernel(*, K, T, Hb, L, n_conv, use_im2col):
    """Fused Jasper block: n_conv x [conv(K)+BN(+ReLU)] chain, 1x1 residual conv+BN,
    add, final ReLU.  Produces one (T, Cout) output tile per grid step."""
    pad = (K - 1) // 2

    def kernel(*refs):
        xc_ref, xl_ref, xr_ref = refs[0], refs[1], refs[2]
        layer_refs = refs[3:3 + 3 * n_conv]                  # (w, scale, bias) per conv layer
        wr_ref, sr_ref, br_ref = refs[3 + 3 * n_conv:6 + 3 * n_conv]
        out_ref = refs[-1]

        l = pl.program_id(1)
        in_dtype = xc_ref.dtype

        def mask_oob(v, halo):
            # zero rows whose absolute sequence position lies outside [0, L)
            pos = l * T - halo + jax.lax.broadcasted_iota(jnp.int32, (v.shape[0], 1), 0)
            return jnp.where((pos >= 0) & (pos < L), v, jnp.zeros_like(v))

        # haloed input window: rows [l*T - Hb, l*T + T + Hb), assembled from three
        # sublane-aligned blocks; edge halos are zeroed by the position mask.
        h = jnp.concatenate([xl_ref[...], xc_ref[...], xr_ref[...]], axis=0)
        halo = Hb
        h = mask_oob(h, halo)

        for i in range(n_conv):
            w_ref, s_ref, b_ref = layer_refs[3 * i:3 * i + 3]
            out_len = h.shape[0] - (K - 1)
            if use_im2col:
                # fold the K taps into one matmul with contraction K*Cin (MXU-friendly)
                xcol = jnp.concatenate([h[k:k + out_len, :] for k in range(K)], axis=-1)
                acc = jnp.dot(xcol, w_ref[...], preferred_element_type=jnp.float32)
            else:
                acc = jnp.zeros((out_len, w_ref.shape[-1]), jnp.float32)
                for k in range(K):
                    acc = acc + jnp.dot(h[k:k + out_len, :], w_ref[k],
                                        preferred_element_type=jnp.float32)
            y = acc * s_ref[0, :] + b_ref[0, :]              # folded conv-bias + eval BN (f32)
            halo -= pad
            if i < n_conv - 1:
                y = jnp.maximum(y, 0.0)                      # sub-block ReLU (Dropout = identity)
                h = mask_oob(y, halo).astype(in_dtype)       # re-impose zero padding at seq edges
            else:
                h = y                                        # last conv: ReLU only after residual

        h = h[halo:halo + T, :]                              # rows at absolute pos [l*T, l*T + T)

        # fused residual branch: 1x1 conv + BN on the un-haloed input tile
        res = jnp.dot(xc_ref[...], wr_ref[...], preferred_element_type=jnp.float32)
        res = res * sr_ref[0, :] + br_ref[0, :]

        out_ref[...] = jnp.maximum(h + res, 0.0).astype(out_ref.dtype)

    return kernel


# ----------------------------------------------------------------------------- params
def init_conv_bn_params(key, in_ch, out_ch, K):
    kw, kb, kg, kbe, km, kv = jax.random.split(key, 6)
    return dict(
        w=jax.random.normal(kw, (out_ch, in_ch, K), jnp.float32) * 0.1,   # PyTorch (O, I, K)
        cb=jax.random.normal(kb, (out_ch,), jnp.float32) * 0.1,           # conv bias
        gamma=1.0 + 0.1 * jax.random.normal(kg, (out_ch,), jnp.float32),
        beta=0.1 * jax.random.normal(kbe, (out_ch,), jnp.float32),
        mean=0.1 * jax.random.normal(km, (out_ch,), jnp.float32),
        var=1.0 + 0.1 * jnp.abs(jax.random.normal(kv, (out_ch,), jnp.float32)),
    )


def fold_bn(p, eps=1e-3):
    """Fold conv bias + eval-mode BatchNorm into per-channel (scale, bias); w -> (K, Cin, Cout)."""
    scale = p["gamma"] / jnp.sqrt(p["var"] + eps)
    bias = (p["cb"] - p["mean"]) * scale + p["beta"]
    w_kio = jnp.transpose(p["w"], (2, 1, 0))
    return w_kio, scale, bias


# ----------------------------------------------------------------------------- forward
def _choose_tile_l(L, Hb, max_tile=512):
    best, t = None, Hb
    while t <= min(L, max_tile):
        if L % t == 0:
            best = t
        t += Hb
    return L if best is None else best


def block_forward(x_ncl, params, kernel_size, stride=1, dilation=1, *, tile_l=None):
    assert stride == 1 and dilation == 1, "non-residual (strided/dilated) path not implemented"
    assert kernel_size % 2 == 1, "same-length conv requires odd kernel size"
    K = kernel_size
    pad = (K - 1) // 2

    x = jnp.transpose(x_ncl, (0, 2, 1))                  # NCL -> (B, L, Cin)
    B, L, Cin = x.shape

    conv_params = list(params["sub"]) + [params["last"]]
    n_conv = len(conv_params)
    Cout = conv_params[-1]["w"].shape[0]

    H = n_conv * pad                                     # total halo of the fused conv chain
    Hb = max(8, ((H + 7) // 8) * 8)                      # halo block height, sublane aligned

    T = _choose_tile_l(L, Hb) if tile_l is None else tile_l
    if T != L:
        assert L % T == 0 and T % Hb == 0, (L, T, Hb)
    nL = pl.cdiv(L, T)
    r = T // Hb if T % Hb == 0 else 1                    # halo-block stride (used when nL > 1)
    n_hblk = pl.cdiv(L, Hb)

    # folded K*Cin contraction only when channels are lane aligned (real Jasper sizes);
    # toy channel counts fall back to K per-tap matmuls.
    use_im2col = (Cin % 128 == 0) and all(p["w"].shape[0] % 128 == 0 for p in conv_params)

    def _const_map(ndim):
        return lambda b, l: (0,) * ndim

    f_specs, f_args = [], []
    for p in conv_params:
        w, s, b = fold_bn(p)                             # (K, Cin_i, Cout_i)
        if use_im2col:
            w = w.reshape(K * w.shape[1], w.shape[2])    # (K*Cin_i, Cout_i)
        s = s.reshape(1, -1)
        b = b.reshape(1, -1)
        f_specs += [pl.BlockSpec(w.shape, _const_map(w.ndim)),
                    pl.BlockSpec(s.shape, _const_map(2)),
                    pl.BlockSpec(b.shape, _const_map(2))]
        f_args += [w, s, b]

    wr, sr, br = fold_bn(params["res"])
    wr = wr.reshape(wr.shape[1], wr.shape[2])            # (Cin, Cout) for the 1x1 residual conv
    sr = sr.reshape(1, -1)
    br = br.reshape(1, -1)
    f_specs += [pl.BlockSpec(wr.shape, _const_map(2)),
                pl.BlockSpec(sr.shape, _const_map(2)),
                pl.BlockSpec(br.shape, _const_map(2))]
    f_args += [wr, sr, br]

    in_specs = [
        pl.BlockSpec((None, T, Cin), lambda b, l: (b, l, 0)),                            # center tile
        pl.BlockSpec((None, Hb, Cin), lambda b, l: (b, jnp.maximum(l * r - 1, 0), 0)),   # left halo
        pl.BlockSpec((None, Hb, Cin), lambda b, l: (b, jnp.minimum((l + 1) * r, n_hblk - 1), 0)),
    ] + f_specs

    kernel = _make_block_kernel(K=K, T=T, Hb=Hb, L=L, n_conv=n_conv, use_im2col=use_im2col)

    out = pl.pallas_call(
        kernel,
        out_shape=jax.ShapeDtypeStruct((B, L, Cout), x.dtype),
        grid=(B, nL),
        in_specs=in_specs,
        out_specs=pl.BlockSpec((None, T, Cout), lambda b, l: (b, l, 0)),
        compiler_params=pltpu.CompilerParams(
            dimension_semantics=("parallel", "parallel"),
            vmem_limit_bytes=48 * 1024 * 1024,
        ),
    )(x, x, x, *f_args)

    return jnp.transpose(out, (0, 2, 1))                 # back to (B, C, L)


# ----------------------------------------------------------------------------- pure-JAX reference
def _ref_conv_bn(x_ncl, p, padding, apply_relu, eps=1e-3):
    y = jax.lax.conv_general_dilated(
        x_ncl, p["w"], window_strides=(1,), padding=[(padding, padding)],
        dimension_numbers=("NCH", "OIH", "NCH"))
    y = y + p["cb"][None, :, None]
    y = (y - p["mean"][None, :, None]) / jnp.sqrt(p["var"] + eps)[None, :, None]
    y = y * p["gamma"][None, :, None] + p["beta"][None, :, None]
    if apply_relu:
        y = jnp.maximum(y, 0.0)
    return y


def block_forward_ref(x_ncl, params, kernel_size):
    padding = (kernel_size - 1) // 2
    h = x_ncl
    for p in params["sub"]:
        h = _ref_conv_bn(h, p, padding, True)
    res = _ref_conv_bn(x_ncl, params["res"], 0, False)
    h = _ref_conv_bn(h, params["last"], padding, False)
    return jnp.maximum(h + res, 0.0)


# ----------------------------------------------------------------------------- main
if __name__ == "__main__":
    key = jax.random.PRNGKey(0)
    n_subblocks = 3
    B, in_ch, out_ch, L, K = 2, 4, 8, 16, 3

    keys = jax.random.split(key, n_subblocks + 2)
    params = {"sub": [], "res": init_conv_bn_params(keys[n_subblocks], in_ch, out_ch, 1)}
    ch = in_ch
    for i in range(n_subblocks - 1):
        params["sub"].append(init_conv_bn_params(keys[i], ch, out_ch, K))
        ch = out_ch
    params["last"] = init_conv_bn_params(keys[n_subblocks - 1], ch, out_ch, K)

    x = jax.random.normal(keys[n_subblocks + 1], (B, in_ch, L), jnp.float32)

    # tile_l=8 forces 2 L-tiles so the halo / edge-masking path is exercised at toy size.
    out = jax.block_until_ready(block_forward(x, params, K, tile_l=8))
    ref = jax.block_until_ready(block_forward_ref(x, params, K))

    assert out.shape == (B, out_ch, L), out.shape
    max_err = float(jnp.max(jnp.abs(out - ref)))
    assert jnp.allclose(out, ref, atol=1e-4, rtol=1e-4), max_err
    print("KERNEL_OK")
</pallas_src>

<mosaic_0001>
module attributes {stable_mosaic.version = 11 : i64} {
  func.func @kernel(%arg0: i32, %arg1: i32, %arg2: memref<1x8x4xf32, #tpu.memory_space<vmem>>, %arg3: memref<1x8x4xf32, #tpu.memory_space<vmem>>, %arg4: memref<1x8x4xf32, #tpu.memory_space<vmem>>, %arg5: memref<3x4x8xf32, #tpu.memory_space<vmem>>, %arg6: memref<1x8xf32, #tpu.memory_space<vmem>>, %arg7: memref<1x8xf32, #tpu.memory_space<vmem>>, %arg8: memref<3x8x8xf32, #tpu.memory_space<vmem>>, %arg9: memref<1x8xf32, #tpu.memory_space<vmem>>, %arg10: memref<1x8xf32, #tpu.memory_space<vmem>>, %arg11: memref<3x8x8xf32, #tpu.memory_space<vmem>>, %arg12: memref<1x8xf32, #tpu.memory_space<vmem>>, %arg13: memref<1x8xf32, #tpu.memory_space<vmem>>, %arg14: memref<4x8xf32, #tpu.memory_space<vmem>>, %arg15: memref<1x8xf32, #tpu.memory_space<vmem>>, %arg16: memref<1x8xf32, #tpu.memory_space<vmem>>, %arg17: memref<1x8x8xf32, #tpu.memory_space<vmem>>) attributes {dimension_semantics = [#tpu.dimension_semantics<parallel>, #tpu.dimension_semantics<parallel>], iteration_bounds = array<i64: 2, 2>, scalar_prefetch = 0 : i64, scratch_operands = 0 : i64, tpu.core_type = #tpu.core_type<tc>, window_params = [{transform_indices = @transform_0, window_bounds = array<i64: 1, 8, 4>}, {transform_indices = @transform_1, window_bounds = array<i64: 1, 8, 4>}, {transform_indices = @transform_2, window_bounds = array<i64: 1, 8, 4>}, {pipeline_mode = #tpu.pipeline_mode<synchronous>, transform_indices = @transform_3, window_bounds = array<i64: 3, 4, 8>}, {pipeline_mode = #tpu.pipeline_mode<synchronous>, transform_indices = @transform_4, window_bounds = array<i64: 1, 8>}, {pipeline_mode = #tpu.pipeline_mode<synchronous>, transform_indices = @transform_5, window_bounds = array<i64: 1, 8>}, {pipeline_mode = #tpu.pipeline_mode<synchronous>, transform_indices = @transform_6, window_bounds = array<i64: 3, 8, 8>}, {pipeline_mode = #tpu.pipeline_mode<synchronous>, transform_indices = @transform_7, window_bounds = array<i64: 1, 8>}, {pipeline_mode = #tpu.pipeline_mode<synchronous>, transform_indices = @transform_8, window_bounds = array<i64: 1, 8>}, {pipeline_mode = #tpu.pipeline_mode<synchronous>, transform_indices = @transform_9, window_bounds = array<i64: 3, 8, 8>}, {pipeline_mode = #tpu.pipeline_mode<synchronous>, transform_indices = @transform_10, window_bounds = array<i64: 1, 8>}, {pipeline_mode = #tpu.pipeline_mode<synchronous>, transform_indices = @transform_11, window_bounds = array<i64: 1, 8>}, {pipeline_mode = #tpu.pipeline_mode<synchronous>, transform_indices = @transform_12, window_bounds = array<i64: 4, 8>}, {pipeline_mode = #tpu.pipeline_mode<synchronous>, transform_indices = @transform_13, window_bounds = array<i64: 1, 8>}, {pipeline_mode = #tpu.pipeline_mode<synchronous>, transform_indices = @transform_14, window_bounds = array<i64: 1, 8>}, {transform_indices = @transform_15, window_bounds = array<i64: 1, 8, 8>}]} {
    %c0 = arith.constant 0 : index
    %c0_0 = arith.constant 0 : index
    %c0_1 = arith.constant 0 : index
    %0 = vector.load %arg3[%c0, %c0_0, %c0_1] : memref<1x8x4xf32, #tpu.memory_space<vmem>>, vector<1x8x4xf32>
    %1 = vector.shape_cast %0 : vector<1x8x4xf32> to vector<8x4xf32>
    %c0_2 = arith.constant 0 : index
    %c0_3 = arith.constant 0 : index
    %c0_4 = arith.constant 0 : index
    %2 = vector.load %arg2[%c0_2, %c0_3, %c0_4] : memref<1x8x4xf32, #tpu.memory_space<vmem>>, vector<1x8x4xf32>
    %3 = vector.shape_cast %2 : vector<1x8x4xf32> to vector<8x4xf32>
    %c0_5 = arith.constant 0 : index
    %c0_6 = arith.constant 0 : index
    %c0_7 = arith.constant 0 : index
    %4 = vector.load %arg4[%c0_5, %c0_6, %c0_7] : memref<1x8x4xf32, #tpu.memory_space<vmem>>, vector<1x8x4xf32>
    %5 = vector.shape_cast %4 : vector<1x8x4xf32> to vector<8x4xf32>
    %6 = tpu.concatenate %1, %3, %5 in 0 : vector<8x4xf32>, vector<8x4xf32>, vector<8x4xf32> -> vector<24x4xf32>
    %c8_i32 = arith.constant 8 : i32
    %7 = arith.muli %arg1, %c8_i32 : i32
    %c8_i32_8 = arith.constant 8 : i32
    %8 = arith.subi %7, %c8_i32_8 : i32
    %9 = tpu.iota {dimensions = array<i32: 0>} : vector<24x1xi32>
    %10 = vector.broadcast %8 : i32 to vector<24x1xi32>
    %11 = arith.addi %10, %9 : vector<24x1xi32>
    %c0_i32 = arith.constant 0 : i32
    %12 = vector.broadcast %c0_i32 : i32 to vector<24x1xi32>
    %13 = arith.cmpi sge, %11, %12 : vector<24x1xi32>
    %c16_i32 = arith.constant 16 : i32
    %14 = vector.broadcast %c16_i32 : i32 to vector<24x1xi32>
    %15 = arith.cmpi slt, %11, %14 : vector<24x1xi32>
    %16 = arith.andi %13, %15 : vector<24x1xi1>
    %cst = arith.constant 0.000000e+00 : f32
    %17 = vector.broadcast %cst : f32 to vector<24x4xf32>
    %18 = vector.shape_cast %16 : vector<24x1xi1> to vector<24x1xi1>
    %19 = vector.broadcast %18 : vector<24x1xi1> to vector<24x4xi1>
    %20 = arith.select %19, %6, %17 : vector<24x4xi1>, vector<24x4xf32>
    %cst_9 = arith.constant 0.000000e+00 : f32
    %21 = vector.broadcast %cst_9 : f32 to vector<22x8xf32>
    %22 = vector.extract_strided_slice %20 {offsets = [0, 0], sizes = [22, 4], strides = [1, 1]} : vector<24x4xf32> to vector<22x4xf32>
    %c0_10 = arith.constant 0 : index
    %c0_11 = arith.constant 0 : index
    %c0_12 = arith.constant 0 : index
    %23 = vector.load %arg5[%c0_10, %c0_11, %c0_12] : memref<3x4x8xf32, #tpu.memory_space<vmem>>, vector<1x4x8xf32>
    %24 = vector.shape_cast %23 : vector<1x4x8xf32> to vector<4x8xf32>
    %cst_13 = arith.constant dense<0.000000e+00> : vector<22x8xf32>
    %25 = tpu.matmul %22, %24, %cst_13 {dimension_numbers = #tpu.dot_dimension_numbers<[1], [0], [0], [1], [0, 0, 1, 1], [], []>} : vector<22x4xf32>, vector<4x8xf32>, vector<22x8xf32> -> vector<22x8xf32>
    %26 = arith.addf %21, %25 : vector<22x8xf32>
    %27 = vector.extract_strided_slice %20 {offsets = [1, 0], sizes = [22, 4], strides = [1, 1]} : vector<24x4xf32> to vector<22x4xf32>
    %c1 = arith.constant 1 : index
    %c0_14 = arith.constant 0 : index
    %c0_15 = arith.constant 0 : index
    %28 = vector.load %arg5[%c1, %c0_14, %c0_15] : memref<3x4x8xf32, #tpu.memory_space<vmem>>, vector<1x4x8xf32>
    %29 = vector.shape_cast %28 : vector<1x4x8xf32> to vector<4x8xf32>
    %cst_16 = arith.constant dense<0.000000e+00> : vector<22x8xf32>
    %30 = tpu.matmul %27, %29, %cst_16 {dimension_numbers = #tpu.dot_dimension_numbers<[1], [0], [0], [1], [0, 0, 1, 1], [], []>} : vector<22x4xf32>, vector<4x8xf32>, vector<22x8xf32> -> vector<22x8xf32>
    %31 = arith.addf %26, %30 : vector<22x8xf32>
    %32 = vector.extract_strided_slice %20 {offsets = [2, 0], sizes = [22, 4], strides = [1, 1]} : vector<24x4xf32> to vector<22x4xf32>
    %c2 = arith.constant 2 : index
    %c0_17 = arith.constant 0 : index
    %c0_18 = arith.constant 0 : index
    %33 = vector.load %arg5[%c2, %c0_17, %c0_18] : memref<3x4x8xf32, #tpu.memory_space<vmem>>, vector<1x4x8xf32>
    %34 = vector.shape_cast %33 : vector<1x4x8xf32> to vector<4x8xf32>
    %cst_19 = arith.constant dense<0.000000e+00> : vector<22x8xf32>
    %35 = tpu.matmul %32, %34, %cst_19 {dimension_numbers = #tpu.dot_dimension_numbers<[1], [0], [0], [1], [0, 0, 1, 1], [], []>} : vector<22x4xf32>, vector<4x8xf32>, vector<22x8xf32> -> vector<22x8xf32>
    %36 = arith.addf %31, %35 : vector<22x8xf32>
    %c0_20 = arith.constant 0 : index
    %c0_21 = arith.constant 0 : index
    %37 = vector.load %arg6[%c0_20, %c0_21] : memref<1x8xf32, #tpu.memory_space<vmem>>, vector<1x8xf32>
    %38 = vector.shape_cast %37 : vector<1x8xf32> to vector<8xf32>
    %39 = vector.shape_cast %38 : vector<8xf32> to vector<1x8xf32>
    %40 = vector.broadcast %39 : vector<1x8xf32> to vector<22x8xf32>
    %41 = arith.mulf %36, %40 : vector<22x8xf32>
    %c0_22 = arith.constant 0 : index
    %c0_23 = arith.constant 0 : index
    %42 = vector.load %arg7[%c0_22, %c0_23] : memref<1x8xf32, #tpu.memory_space<vmem>>, vector<1x8xf32>
    %43 = vector.shape_cast %42 : vector<1x8xf32> to vector<8xf32>
    %44 = vector.shape_cast %43 : vector<8xf32> to vector<1x8xf32>
    %45 = vector.broadcast %44 : vector<1x8xf32> to vector<22x8xf32>
    %46 = arith.addf %41, %45 : vector<22x8xf32>
    %cst_24 = arith.constant 0.000000e+00 : f32
    %47 = vector.broadcast %cst_24 : f32 to vector<22x8xf32>
    %48 = arith.maximumf %46, %47 : vector<22x8xf32>
    %c8_i32_25 = arith.constant 8 : i32
    %49 = arith.muli %arg1, %c8_i32_25 : i32
    %c7_i32 = arith.constant 7 : i32
    %50 = arith.subi %49, %c7_i32 : i32
    %51 = tpu.iota {dimensions = array<i32: 0>} : vector<22x1xi32>
    %52 = vector.broadcast %50 : i32 to vector<22x1xi32>
    %53 = arith.addi %52, %51 : vector<22x1xi32>
    %c0_i32_26 = arith.constant 0 : i32
    %54 = vector.broadcast %c0_i32_26 : i32 to vector<22x1xi32>
    %55 = arith.cmpi sge, %53, %54 : vector<22x1xi32>
    %c16_i32_27 = arith.constant 16 : i32
    %56 = vector.broadcast %c16_i32_27 : i32 to vector<22x1xi32>
    %57 = arith.cmpi slt, %53, %56 : vector<22x1xi32>
    %58 = arith.andi %55, %57 : vector<22x1xi1>
    %cst_28 = arith.constant 0.000000e+00 : f32
    %59 = vector.broadcast %cst_28 : f32 to vector<22x8xf32>
    %60 = vector.shape_cast %58 : vector<22x1xi1> to vector<22x1xi1>
    %61 = vector.broadcast %60 : vector<22x1xi1> to vector<22x8xi1>
    %62 = arith.select %61, %48, %59 : vector<22x8xi1>, vector<22x8xf32>
    %cst_29 = arith.constant 0.000000e+00 : f32
    %63 = vector.broadcast %cst_29 : f32 to vector<20x8xf32>
    %64 = vector.extract_strided_slice %62 {offsets = [0, 0], sizes = [20, 8], strides = [1, 1]} : vector<22x8xf32> to vector<20x8xf32>
    %c0_30 = arith.constant 0 : index
    %c0_31 = arith.constant 0 : index
    %c0_32 = arith.constant 0 : index
    %65 = vector.load %arg8[%c0_30, %c0_31, %c0_32] : memref<3x8x8xf32, #tpu.memory_space<vmem>>, vector<1x8x8xf32>
    %66 = vector.shape_cast %65 : vector<1x8x8xf32> to vector<8x8xf32>
    %cst_33 = arith.constant dense<0.000000e+00> : vector<20x8xf32>
    %67 = tpu.matmul %64, %66, %cst_33 {dimension_numbers = #tpu.dot_dimension_numbers<[1], [0], [0], [1], [0, 0, 1, 1], [], []>} : vector<20x8xf32>, vector<8x8xf32>, vector<20x8xf32> -> vector<20x8xf32>
    %68 = arith.addf %63, %67 : vector<20x8xf32>
    %69 = vector.extract_strided_slice %62 {offsets = [1, 0], sizes = [20, 8], strides = [1, 1]} : vector<22x8xf32> to vector<20x8xf32>
    %c1_34 = arith.constant 1 : index
    %c0_35 = arith.constant 0 : index
    %c0_36 = arith.constant 0 : index
    %70 = vector.load %arg8[%c1_34, %c0_35, %c0_36] : memref<3x8x8xf32, #tpu.memory_space<vmem>>, vector<1x8x8xf32>
    %71 = vector.shape_cast %70 : vector<1x8x8xf32> to vector<8x8xf32>
    %cst_37 = arith.constant dense<0.000000e+00> : vector<20x8xf32>
    %72 = tpu.matmul %69, %71, %cst_37 {dimension_numbers = #tpu.dot_dimension_numbers<[1], [0], [0], [1], [0, 0, 1, 1], [], []>} : vector<20x8xf32>, vector<8x8xf32>, vector<20x8xf32> -> vector<20x8xf32>
    %73 = arith.addf %68, %72 : vector<20x8xf32>
    %74 = vector.extract_strided_slice %62 {offsets = [2, 0], sizes = [20, 8], strides = [1, 1]} : vector<22x8xf32> to vector<20x8xf32>
    %c2_38 = arith.constant 2 : index
    %c0_39 = arith.constant 0 : index
    %c0_40 = arith.constant 0 : index
    %75 = vector.load %arg8[%c2_38, %c0_39, %c0_40] : memref<3x8x8xf32, #tpu.memory_space<vmem>>, vector<1x8x8xf32>
    %76 = vector.shape_cast %75 : vector<1x8x8xf32> to vector<8x8xf32>
    %cst_41 = arith.constant dense<0.000000e+00> : vector<20x8xf32>
    %77 = tpu.matmul %74, %76, %cst_41 {dimension_numbers = #tpu.dot_dimension_numbers<[1], [0], [0], [1], [0, 0, 1, 1], [], []>} : vector<20x8xf32>, vector<8x8xf32>, vector<20x8xf32> -> vector<20x8xf32>
    %78 = arith.addf %73, %77 : vector<20x8xf32>
    %c0_42 = arith.constant 0 : index
    %c0_43 = arith.constant 0 : index
    %79 = vector.load %arg9[%c0_42, %c0_43] : memref<1x8xf32, #tpu.memory_space<vmem>>, vector<1x8xf32>
    %80 = vector.shape_cast %79 : vector<1x8xf32> to vector<8xf32>
    %81 = vector.shape_cast %80 : vector<8xf32> to vector<1x8xf32>
    %82 = vector.broadcast %81 : vector<1x8xf32> to vector<20x8xf32>
    %83 = arith.mulf %78, %82 : vector<20x8xf32>
    %c0_44 = arith.constant 0 : index
    %c0_45 = arith.constant 0 : index
    %84 = vector.load %arg10[%c0_44, %c0_45] : memref<1x8xf32, #tpu.memory_space<vmem>>, vector<1x8xf32>
    %85 = vector.shape_cast %84 : vector<1x8xf32> to vector<8xf32>
    %86 = vector.shape_cast %85 : vector<8xf32> to vector<1x8xf32>
    %87 = vector.broadcast %86 : vector<1x8xf32> to vector<20x8xf32>
    %88 = arith.addf %83, %87 : vector<20x8xf32>
    %cst_46 = arith.constant 0.000000e+00 : f32
    %89 = vector.broadcast %cst_46 : f32 to vector<20x8xf32>
    %90 = arith.maximumf %88, %89 : vector<20x8xf32>
    %c8_i32_47 = arith.constant 8 : i32
    %91 = arith.muli %arg1, %c8_i32_47 : i32
    %c6_i32 = arith.constant 6 : i32
    %92 = arith.subi %91, %c6_i32 : i32
    %93 = tpu.iota {dimensions = array<i32: 0>} : vector<20x1xi32>
    %94 = vector.broadcast %92 : i32 to vector<20x1xi32>
    %95 = arith.addi %94, %93 : vector<20x1xi32>
    %c0_i32_48 = arith.constant 0 : i32
    %96 = vector.broadcast %c0_i32_48 : i32 to vector<20x1xi32>
    %97 = arith.cmpi sge, %95, %96 : vector<20x1xi32>
    %c16_i32_49 = arith.constant 16 : i32
    %98 = vector.broadcast %c16_i32_49 : i32 to vector<20x1xi32>
    %99 = arith.cmpi slt, %95, %98 : vector<20x1xi32>
    %100 = arith.andi %97, %99 : vector<20x1xi1>
    %cst_50 = arith.constant 0.000000e+00 : f32
    %101 = vector.broadcast %cst_50 : f32 to vector<20x8xf32>
    %102 = vector.shape_cast %100 : vector<20x1xi1> to vector<20x1xi1>
    %103 = vector.broadcast %102 : vector<20x1xi1> to vector<20x8xi1>
    %104 = arith.select %103, %90, %101 : vector<20x8xi1>, vector<20x8xf32>
    %cst_51 = arith.constant 0.000000e+00 : f32
    %105 = vector.broadcast %cst_51 : f32 to vector<18x8xf32>
    %106 = vector.extract_strided_slice %104 {offsets = [0, 0], sizes = [18, 8], strides = [1, 1]} : vector<20x8xf32> to vector<18x8xf32>
    %c0_52 = arith.constant 0 : index
    %c0_53 = arith.constant 0 : index
    %c0_54 = arith.constant 0 : index
    %107 = vector.load %arg11[%c0_52, %c0_53, %c0_54] : memref<3x8x8xf32, #tpu.memory_space<vmem>>, vector<1x8x8xf32>
    %108 = vector.shape_cast %107 : vector<1x8x8xf32> to vector<8x8xf32>
    %cst_55 = arith.constant dense<0.000000e+00> : vector<18x8xf32>
    %109 = tpu.matmul %106, %108, %cst_55 {dimension_numbers = #tpu.dot_dimension_numbers<[1], [0], [0], [1], [0, 0, 1, 1], [], []>} : vector<18x8xf32>, vector<8x8xf32>, vector<18x8xf32> -> vector<18x8xf32>
    %110 = arith.addf %105, %109 : vector<18x8xf32>
    %111 = vector.extract_strided_slice %104 {offsets = [1, 0], sizes = [18, 8], strides = [1, 1]} : vector<20x8xf32> to vector<18x8xf32>
    %c1_56 = arith.constant 1 : index
    %c0_57 = arith.constant 0 : index
    %c0_58 = arith.constant 0 : index
    %112 = vector.load %arg11[%c1_56, %c0_57, %c0_58] : memref<3x8x8xf32, #tpu.memory_space<vmem>>, vector<1x8x8xf32>
    %113 = vector.shape_cast %112 : vector<1x8x8xf32> to vector<8x8xf32>
    %cst_59 = arith.constant dense<0.000000e+00> : vector<18x8xf32>
    %114 = tpu.matmul %111, %113, %cst_59 {dimension_numbers = #tpu.dot_dimension_numbers<[1], [0], [0], [1], [0, 0, 1, 1], [], []>} : vector<18x8xf32>, vector<8x8xf32>, vector<18x8xf32> -> vector<18x8xf32>
    %115 = arith.addf %110, %114 : vector<18x8xf32>
    %116 = vector.extract_strided_slice %104 {offsets = [2, 0], sizes = [18, 8], strides = [1, 1]} : vector<20x8xf32> to vector<18x8xf32>
    %c2_60 = arith.constant 2 : index
    %c0_61 = arith.constant 0 : index
    %c0_62 = arith.constant 0 : index
    %117 = vector.load %arg11[%c2_60, %c0_61, %c0_62] : memref<3x8x8xf32, #tpu.memory_space<vmem>>, vector<1x8x8xf32>
    %118 = vector.shape_cast %117 : vector<1x8x8xf32> to vector<8x8xf32>
    %cst_63 = arith.constant dense<0.000000e+00> : vector<18x8xf32>
    %119 = tpu.matmul %116, %118, %cst_63 {dimension_numbers = #tpu.dot_dimension_numbers<[1], [0], [0], [1], [0, 0, 1, 1], [], []>} : vector<18x8xf32>, vector<8x8xf32>, vector<18x8xf32> -> vector<18x8xf32>
    %120 = arith.addf %115, %119 : vector<18x8xf32>
    %c0_64 = arith.constant 0 : index
    %c0_65 = arith.constant 0 : index
    %121 = vector.load %arg12[%c0_64, %c0_65] : memref<1x8xf32, #tpu.memory_space<vmem>>, vector<1x8xf32>
    %122 = vector.shape_cast %121 : vector<1x8xf32> to vector<8xf32>
    %123 = vector.shape_cast %122 : vector<8xf32> to vector<1x8xf32>
    %124 = vector.broadcast %123 : vector<1x8xf32> to vector<18x8xf32>
    %125 = arith.mulf %120, %124 : vector<18x8xf32>
    %c0_66 = arith.constant 0 : index
    %c0_67 = arith.constant 0 : index
    %126 = vector.load %arg13[%c0_66, %c0_67] : memref<1x8xf32, #tpu.memory_space<vmem>>, vector<1x8xf32>
    %127 = vector.shape_cast %126 : vector<1x8xf32> to vector<8xf32>
    %128 = vector.shape_cast %127 : vector<8xf32> to vector<1x8xf32>
    %129 = vector.broadcast %128 : vector<1x8xf32> to vector<18x8xf32>
    %130 = arith.addf %125, %129 : vector<18x8xf32>
    %131 = vector.extract_strided_slice %130 {offsets = [5, 0], sizes = [8, 8], strides = [1, 1]} : vector<18x8xf32> to vector<8x8xf32>
    %c0_68 = arith.constant 0 : index
    %c0_69 = arith.constant 0 : index
    %c0_70 = arith.constant 0 : index
    %132 = vector.load %arg2[%c0_68, %c0_69, %c0_70] : memref<1x8x4xf32, #tpu.memory_space<vmem>>, vector<1x8x4xf32>
    %133 = vector.shape_cast %132 : vector<1x8x4xf32> to vector<8x4xf32>
    %c0_71 = arith.constant 0 : index
    %c0_72 = arith.constant 0 : index
    %134 = vector.load %arg14[%c0_71, %c0_72] : memref<4x8xf32, #tpu.memory_space<vmem>>, vector<4x8xf32>
    %cst_73 = arith.constant dense<0.000000e+00> : vector<8x8xf32>
    %135 = tpu.matmul %133, %134, %cst_73 {dimension_numbers = #tpu.dot_dimension_numbers<[1], [0], [0], [1], [0, 0, 1, 1], [], []>} : vector<8x4xf32>, vector<4x8xf32>, vector<8x8xf32> -> vector<8x8xf32>
    %c0_74 = arith.constant 0 : index
    %c0_75 = arith.constant 0 : index
    %136 = vector.load %arg15[%c0_74, %c0_75] : memref<1x8xf32, #tpu.memory_space<vmem>>, vector<1x8xf32>
    %137 = vector.shape_cast %136 : vector<1x8xf32> to vector<8xf32>
    %138 = vector.shape_cast %137 : vector<8xf32> to vector<1x8xf32>
    %139 = vector.broadcast %138 : vector<1x8xf32> to vector<8x8xf32>
    %140 = arith.mulf %135, %139 : vector<8x8xf32>
    %c0_76 = arith.constant 0 : index
    %c0_77 = arith.constant 0 : index
    %141 = vector.load %arg16[%c0_76, %c0_77] : memref<1x8xf32, #tpu.memory_space<vmem>>, vector<1x8xf32>
    %142 = vector.shape_cast %141 : vector<1x8xf32> to vector<8xf32>
    %143 = vector.shape_cast %142 : vector<8xf32> to vector<1x8xf32>
    %144 = vector.broadcast %143 : vector<1x8xf32> to vector<8x8xf32>
    %145 = arith.addf %140, %144 : vector<8x8xf32>
    %146 = arith.addf %131, %145 : vector<8x8xf32>
    %cst_78 = arith.constant 0.000000e+00 : f32
    %147 = vector.broadcast %cst_78 : f32 to vector<8x8xf32>
    %148 = arith.maximumf %146, %147 : vector<8x8xf32>
    %c0_79 = arith.constant 0 : index
    %c0_80 = arith.constant 0 : index
    %c0_81 = arith.constant 0 : index
    %149 = vector.load %arg17[%c0_79, %c0_80, %c0_81] : memref<1x8x8xf32, #tpu.memory_space<vmem>>, vector<1x8x8xf32>
    %150 = vector.shape_cast %149 : vector<1x8x8xf32> to vector<8x8xf32>
    %151 = vector.shape_cast %148 : vector<8x8xf32> to vector<1x8x8xf32>
    tpu.vector_store %arg17[%c0_79, %c0_80, %c0_81], %151 {strides = array<i32>} : memref<1x8x8xf32, #tpu.memory_space<vmem>>, vector<1x8x8xf32>,
    return
  }
  func.func @transform_0(%arg0: i32, %arg1: i32) -> (i32, i32, i32) {
    %c0_i32 = arith.constant 0 : i32
    %c0_i32_0 = arith.constant 0 : i32
    return %arg0, %arg1, %c0_i32 : i32, i32, i32
  }
  func.func @transform_1(%arg0: i32, %arg1: i32) -> (i32, i32, i32) {
    %c1_i32 = arith.constant 1 : i32
    %0 = arith.muli %arg1, %c1_i32 : i32
    %c1_i32_0 = arith.constant 1 : i32
    %1 = arith.subi %0, %c1_i32_0 : i32
    %c0_i32 = arith.constant 0 : i32
    %2 = arith.maxsi %1, %c0_i32 : i32
    %c0_i32_1 = arith.constant 0 : i32
    %c0_i32_2 = arith.constant 0 : i32
    return %arg0, %2, %c0_i32_1 : i32, i32, i32
  }
  func.func @transform_2(%arg0: i32, %arg1: i32) -> (i32, i32, i32) {
    %c1_i32 = arith.constant 1 : i32
    %0 = arith.addi %arg1, %c1_i32 : i32
    %c1_i32_0 = arith.constant 1 : i32
    %1 = arith.muli %0, %c1_i32_0 : i32
    %c1_i32_1 = arith.constant 1 : i32
    %2 = arith.minsi %1, %c1_i32_1 : i32
    %c0_i32 = arith.constant 0 : i32
    %c0_i32_2 = arith.constant 0 : i32
    return %arg0, %2, %c0_i32 : i32, i32, i32
  }
  func.func @transform_3(%arg0: i32, %arg1: i32) -> (i32, i32, i32) {
    %c0_i32 = arith.constant 0 : i32
    %c0_i32_0 = arith.constant 0 : i32
    %c0_i32_1 = arith.constant 0 : i32
    %c0_i32_2 = arith.constant 0 : i32
    return %c0_i32, %c0_i32_0, %c0_i32_1 : i32, i32, i32
  }
  func.func @transform_4(%arg0: i32, %arg1: i32) -> (i32, i32) {
    %c0_i32 = arith.constant 0 : i32
    %c0_i32_0 = arith.constant 0 : i32
    %c0_i32_1 = arith.constant 0 : i32
    return %c0_i32, %c0_i32_0 : i32, i32
  }
  func.func @transform_5(%arg0: i32, %arg1: i32) -> (i32, i32) {
    %c0_i32 = arith.constant 0 : i32
    %c0_i32_0 = arith.constant 0 : i32
    %c0_i32_1 = arith.constant 0 : i32
    return %c0_i32, %c0_i32_0 : i32, i32
  }
  func.func @transform_6(%arg0: i32, %arg1: i32) -> (i32, i32, i32) {
    %c0_i32 = arith.constant 0 : i32
    %c0_i32_0 = arith.constant 0 : i32
    %c0_i32_1 = arith.constant 0 : i32
    %c0_i32_2 = arith.constant 0 : i32
    return %c0_i32, %c0_i32_0, %c0_i32_1 : i32, i32, i32
  }
  func.func @transform_7(%arg0: i32, %arg1: i32) -> (i32, i32) {
    %c0_i32 = arith.constant 0 : i32
    %c0_i32_0 = arith.constant 0 : i32
    %c0_i32_1 = arith.constant 0 : i32
    return %c0_i32, %c0_i32_0 : i32, i32
  }
  func.func @transform_8(%arg0: i32, %arg1: i32) -> (i32, i32) {
    %c0_i32 = arith.constant 0 : i32
    %c0_i32_0 = arith.constant 0 : i32
    %c0_i32_1 = arith.constant 0 : i32
    return %c0_i32, %c0_i32_0 : i32, i32
  }
  func.func @transform_9(%arg0: i32, %arg1: i32) -> (i32, i32, i32) {
    %c0_i32 = arith.constant 0 : i32
    %c0_i32_0 = arith.constant 0 : i32
    %c0_i32_1 = arith.constant 0 : i32
    %c0_i32_2 = arith.constant 0 : i32
    return %c0_i32, %c0_i32_0, %c0_i32_1 : i32, i32, i32
  }
  func.func @transform_10(%arg0: i32, %arg1: i32) -> (i32, i32) {
    %c0_i32 = arith.constant 0 : i32
    %c0_i32_0 = arith.constant 0 : i32
    %c0_i32_1 = arith.constant 0 : i32
    return %c0_i32, %c0_i32_0 : i32, i32
  }
  func.func @transform_11(%arg0: i32, %arg1: i32) -> (i32, i32) {
    %c0_i32 = arith.constant 0 : i32
    %c0_i32_0 = arith.constant 0 : i32
    %c0_i32_1 = arith.constant 0 : i32
    return %c0_i32, %c0_i32_0 : i32, i32
  }
  func.func @transform_12(%arg0: i32, %arg1: i32) -> (i32, i32) {
    %c0_i32 = arith.constant 0 : i32
    %c0_i32_0 = arith.constant 0 : i32
    %c0_i32_1 = arith.constant 0 : i32
    return %c0_i32, %c0_i32_0 : i32, i32
  }
  func.func @transform_13(%arg0: i32, %arg1: i32) -> (i32, i32) {
    %c0_i32 = arith.constant 0 : i32
    %c0_i32_0 = arith.constant 0 : i32
    %c0_i32_1 = arith.constant 0 : i32
    return %c0_i32, %c0_i32_0 : i32, i32
  }
  func.func @transform_14(%arg0: i32, %arg1: i32) -> (i32, i32) {
    %c0_i32 = arith.constant 0 : i32
    %c0_i32_0 = arith.constant 0 : i32
    %c0_i32_1 = arith.constant 0 : i32
    return %c0_i32, %c0_i32_0 : i32, i32
  }
  func.func @transform_15(%arg0: i32, %arg1: i32) -> (i32, i32, i32) {
    %c0_i32 = arith.constant 0 : i32
    %c0_i32_0 = arith.constant 0 : i32
    return %arg0, %arg1, %c0_i32 : i32, i32, i32
  }
}

</mosaic_0001>

<llo_original>
// kernel: tpu_custom_call.1
$region0: #{tpu_custom_call.1}
  #allocation0 [shape = 'u32[]', space=smem, size = 0x4, offset = 0x4, fixed_abs, tag = 'smem constant byte address 0x4 - core index']
  #allocation1 [shape = 'u32[144,128]{1,0:T(1,128)}', space=vmem, size = 0x12000, scoped, tag = 'internal scratch']
  %s0 = inlined_call_operand.vmem [shape: f32[2,16,4], index: 0, kind: input, shape index: {}]
  %s1 = inlined_call_operand.vmem [shape: f32[2,16,4], index: 1, kind: input, shape index: {}]
  %s2 = inlined_call_operand.vmem [shape: f32[2,16,4], index: 2, kind: input, shape index: {}]
  %s3 = inlined_call_operand.vmem [shape: f32[3,4,8], index: 3, kind: input, shape index: {}]
  %s4 = inlined_call_operand.vmem [shape: f32[1,8], index: 4, kind: input, shape index: {}]
  %s5 = inlined_call_operand.vmem [shape: f32[1,8], index: 5, kind: input, shape index: {}]
  %s6 = inlined_call_operand.vmem [shape: f32[3,8,8], index: 6, kind: input, shape index: {}]
  %s7 = inlined_call_operand.vmem [shape: f32[1,8], index: 7, kind: input, shape index: {}]
  %s8 = inlined_call_operand.vmem [shape: f32[1,8], index: 8, kind: input, shape index: {}]
  %s9 = inlined_call_operand.vmem [shape: f32[3,8,8], index: 9, kind: input, shape index: {}]
  %s10 = inlined_call_operand.vmem [shape: f32[1,8], index: 10, kind: input, shape index: {}]
  %s11 = inlined_call_operand.vmem [shape: f32[1,8], index: 11, kind: input, shape index: {}]
  %s12 = inlined_call_operand.vmem [shape: f32[4,8], index: 12, kind: input, shape index: {}]
  %s13 = inlined_call_operand.vmem [shape: f32[1,8], index: 13, kind: input, shape index: {}]
  %s14 = inlined_call_operand.vmem [shape: f32[1,8], index: 14, kind: input, shape index: {}]
  %s15 = inlined_call_operand.vmem [shape: f32[2,16,8], index: 15, kind: output, shape index: {}]
  %s16 = sld [smem:[#allocation0]]
  $region93: #{tpu_custom_call.1} parent=0
    _
  %s18 = ssub.s32 1, %s16
  %s19 = scalar_select 0, %s18, %s16
  loop: start=0, step=1, limit=6
  $region2: #{tpu_custom_call.1} parent=0 // loop_pre_header
    _
  $region3: #{tpu_custom_call.1} parent=0 // loop_header
    %s21 = sphi 0, %s25
    %p22 = scmp.ge.s32.totalorder %s21, 6
    %s28 = sphi 0, %s40
    %s29 = sphi 0, %s36
    %s30 = sphi 0, %s28
    %s31 = sphi 0, %s29
    %s32 = sphi 0, %s30
    %s33 = sphi 0, %s31
    %s45 = sphi 0, %s47
    %s48 = sphi 0, %s45
    %s49 = sphi 0, %s48
    %s65 = sphi 0, %s49
    %s79 = sphi 0, %s81
    %s82 = sphi 0, %s79
    %s83 = sphi 0, %s82
    %s99 = sphi 0, %s83
    %s113 = sphi 0, %s115
    %s116 = sphi 0, %s113
    %s117 = sphi 0, %s116
    %s133 = sphi 0, %s117
    %s137 = sphi 0, %s137
    %s139 = sphi 0, %s137
    %s140 = sphi 0, %s139
    %s154 = sphi 0, %s140
    %s158 = sphi 0, %s158
    %s160 = sphi 0, %s158
    %s161 = sphi 0, %s160
    %s175 = sphi 0, %s161
    %s179 = sphi 0, %s179
    %s181 = sphi 0, %s179
    %s182 = sphi 0, %s181
    %s196 = sphi 0, %s182
    %s200 = sphi 0, %s200
    %s202 = sphi 0, %s200
    %s203 = sphi 0, %s202
    %s217 = sphi 0, %s203
    %s221 = sphi 0, %s221
    %s223 = sphi 0, %s221
    %s224 = sphi 0, %s223
    %s238 = sphi 0, %s224
    %s242 = sphi 0, %s242
    %s244 = sphi 0, %s242
    %s245 = sphi 0, %s244
    %s259 = sphi 0, %s245
    %s263 = sphi 0, %s263
    %s265 = sphi 0, %s263
    %s266 = sphi 0, %s265
    %s280 = sphi 0, %s266
    %s284 = sphi 0, %s284
    %s286 = sphi 0, %s284
    %s287 = sphi 0, %s286
    %s301 = sphi 0, %s287
    %s305 = sphi 0, %s305
    %s307 = sphi 0, %s305
    %s308 = sphi 0, %s307
    %s322 = sphi 0, %s308
    %s326 = sphi 0, %s326
    %s328 = sphi 0, %s326
    %s329 = sphi 0, %s328
    %s343 = sphi 0, %s329
    %s347 = sphi 0, %s347
    %s349 = sphi 0, %s347
    %s350 = sphi 0, %s349
    %s364 = sphi 0, %s350
    %s368 = sphi 0, %s368
    %s370 = sphi 0, %s368
    %s371 = sphi 0, %s370
    %s385 = sphi 0, %s371
    %s393 = sphi 0, %s395
    %s396 = sphi 0, %s393
    %s397 = sphi 0, %s396
    %s413 = sphi 0, %s397
  $region4: #{tpu_custom_call.1} parent=0 // loop_header_branch
    %24 = sbr.rel (%p22) target = $region8
  $region5: #{tpu_custom_call.1} parent=0 // loop_body
    %s26 = ssub.s32 %s21, 1
    %s27 = ssub.s32 %s21, 2
    %s34 = sadd.s32 1, %s29
    %p35 = scmp.ge.s32.totalorder %s34, 2
    %s36 = scalar_select %p35, 0, %s34
    %s37 = sadd.s32 1, %s28
    %s38 = scalar_select %p35, %s37, %s28
    %p39 = scmp.ge.s32.totalorder %s38, 2
    %s40 = scalar_select %p39, 0, %s38
    %s41 = ssub.s32 %s28, %s40
    %s42 = ssub.s32 %s29, %s36
    %s43 = sor.u32 %s41, %s42
    %p44 = scmp.eq.s32.totalorder %s43, 0
    %s46 = sadd.s32 %s45, 1
    %s47 = scalar_select %p44, %s45, %s46
    %p50 = pneg %p44
    %p51 = scmp.eq.s32.totalorder %s21, 3
    %p52 = por %p50, %p51
    %p53 = scmp.ne.s32.totalorder %s45, %s48
    %p54 = scmp.eq.s32.totalorder %s21, 0
    %p55 = por %p53, %p54
    %p56 = scmp.ne.s32.totalorder %s45, %s48
    %p57 = scmp.eq.s32.totalorder %s26, 3
    %p58 = por %p56, %p57
    %p59 = scmp.ne.s32.totalorder %s48, %s49
    %p60 = scmp.eq.s32.totalorder %s26, 0
    %p61 = por %p59, %p60
    %p62 = scmp.ne.s32.totalorder %s48, %s49
    %p63 = scmp.eq.s32.totalorder %s27, 3
    %p64 = por %p62, %p63
    %p66 = scmp.ne.s32.totalorder %s49, %s65
    %p67 = scmp.eq.s32.totalorder %s27, 0
    %p68 = por %p66, %p67
    %s69 = ssub.s32 %s29, 1
    %p70 = scmp.gt.s32.totalorder %s69, 0
    %s71 = scalar_select %p70, %s69, 0
    %s72 = ssub.s32 %s36, 1
    %p73 = scmp.gt.s32.totalorder %s72, 0
    %s74 = scalar_select %p73, %s72, 0
    %s75 = ssub.s32 %s28, %s40
    %s76 = ssub.s32 %s71, %s74
    %s77 = sor.u32 %s75, %s76
    %p78 = scmp.eq.s32.totalorder %s77, 0
    %s80 = sadd.s32 %s79, 1
    %s81 = scalar_select %p78, %s79, %s80
    %p84 = pneg %p78
    %p85 = scmp.eq.s32.totalorder %s21, 3
    %p86 = por %p84, %p85
    %p87 = scmp.ne.s32.totalorder %s79, %s82
    %p88 = scmp.eq.s32.totalorder %s21, 0
    %p89 = por %p87, %p88
    %p90 = scmp.ne.s32.totalorder %s79, %s82
    %p91 = scmp.eq.s32.totalorder %s26, 3
    %p92 = por %p90, %p91
    %p93 = scmp.ne.s32.totalorder %s82, %s83
    %p94 = scmp.eq.s32.totalorder %s26, 0
    %p95 = por %p93, %p94
    %p96 = scmp.ne.s32.totalorder %s82, %s83
    %p97 = scmp.eq.s32.totalorder %s27, 3
    %p98 = por %p96, %p97
    %p100 = scmp.ne.s32.totalorder %s83, %s99
    %p101 = scmp.eq.s32.totalorder %s27, 0
    %p102 = por %p100, %p101
    %s103 = sadd.s32 %s29, 1
    %p104 = scmp.lt.s32.totalorder %s103, 1
    %s105 = scalar_select %p104, %s103, 1
    %s106 = sadd.s32 %s36, 1
    %p107 = scmp.lt.s32.totalorder %s106, 1
    %s108 = scalar_select %p107, %s106, 1
    %s109 = ssub.s32 %s28, %s40
    %s110 = ssub.s32 %s105, %s108
    %s111 = sor.u32 %s109, %s110
    %p112 = scmp.eq.s32.totalorder %s111, 0
    %s114 = sadd.s32 %s113, 1
    %s115 = scalar_select %p112, %s113, %s114
    %p118 = pneg %p112
    %p119 = scmp.eq.s32.totalorder %s21, 3
    %p120 = por %p118, %p119
    %p121 = scmp.ne.s32.totalorder %s113, %s116
    %p122 = scmp.eq.s32.totalorder %s21, 0
    %p123 = por %p121, %p122
    %p124 = scmp.ne.s32.totalorder %s113, %s116
    %p125 = scmp.eq.s32.totalorder %s26, 3
    %p126 = por %p124, %p125
    %p127 = scmp.ne.s32.totalorder %s116, %s117
    %p128 = scmp.eq.s32.totalorder %s26, 0
    %p129 = por %p127, %p128
    %p130 = scmp.ne.s32.totalorder %s116, %s117
    %p131 = scmp.eq.s32.totalorder %s27, 3
    %p132 = por %p130, %p131
    %p134 = scmp.ne.s32.totalorder %s117, %s133
    %p135 = scmp.eq.s32.totalorder %s27, 0
    %p136 = por %p134, %p135
    %s138 = sadd.s32 %s137, 1
    %p141 = scmp.eq.s32.totalorder %s21, 3
    %p142 = scmp.ne.s32.totalorder %s137, %s139
    %p143 = scmp.eq.s32.totalorder %s21, 0
    %p144 = por %p142, %p143
    %p145 = scmp.ne.s32.totalorder %s137, %s139
    %p146 = scmp.eq.s32.totalorder %s26, 3
    %p147 = por %p145, %p146
    %p148 = scmp.ne.s32.totalorder %s139, %s140
    %p149 = scmp.eq.s32.totalorder %s26, 0
    %p150 = por %p148, %p149
    %p151 = scmp.ne.s32.totalorder %s139, %s140
    %p152 = scmp.eq.s32.totalorder %s27, 3
    %p153 = por %p151, %p152
    %p155 = scmp.ne.s32.totalorder %s140, %s154
    %p156 = scmp.eq.s32.totalorder %s27, 0
    %p157 = por %p155, %p156
    %s159 = sadd.s32 %s158, 1
    %p162 = scmp.eq.s32.totalorder %s21, 3
    %p163 = scmp.ne.s32.totalorder %s158, %s160
    %p164 = scmp.eq.s32.totalorder %s21, 0
    %p165 = por %p163, %p164
    %p166 = scmp.ne.s32.totalorder %s158, %s160
    %p167 = scmp.eq.s32.totalorder %s26, 3
    %p168 = por %p166, %p167
    %p169 = scmp.ne.s32.totalorder %s160, %s161
    %p170 = scmp.eq.s32.totalorder %s26, 0
    %p171 = por %p169, %p170
    %p172 = scmp.ne.s32.totalorder %s160, %s161
    %p173 = scmp.eq.s32.totalorder %s27, 3
    %p174 = por %p172, %p173
    %p176 = scmp.ne.s32.totalorder %s161, %s175
    %p177 = scmp.eq.s32.totalorder %s27, 0
    %p178 = por %p176, %p177
    %s180 = sadd.s32 %s179, 1
    %p183 = scmp.eq.s32.totalorder %s21, 3
    %p184 = scmp.ne.s32.totalorder %s179, %s181
    %p185 = scmp.eq.s32.totalorder %s21, 0
    %p186 = por %p184, %p185
    %p187 = scmp.ne.s32.totalorder %s179, %s181
    %p188 = scmp.eq.s32.totalorder %s26, 3
    %p189 = por %p187, %p188
    %p190 = scmp.ne.s32.totalorder %s181, %s182
    %p191 = scmp.eq.s32.totalorder %s26, 0
    %p192 = por %p190, %p191
    %p193 = scmp.ne.s32.totalorder %s181, %s182
    %p194 = scmp.eq.s32.totalorder %s27, 3
    %p195 = por %p193, %p194
    %p197 = scmp.ne.s32.totalorder %s182, %s196
    %p198 = scmp.eq.s32.totalorder %s27, 0
    %p199 = por %p197, %p198
    %s201 = sadd.s32 %s200, 1
    %p204 = scmp.eq.s32.totalorder %s21, 3
    %p205 = scmp.ne.s32.totalorder %s200, %s202
    %p206 = scmp.eq.s32.totalorder %s21, 0
    %p207 = por %p205, %p206
    %p208 = scmp.ne.s32.totalorder %s200, %s202
    %p209 = scmp.eq.s32.totalorder %s26, 3
    %p210 = por %p208, %p209
    %p211 = scmp.ne.s32.totalorder %s202, %s203
    %p212 = scmp.eq.s32.totalorder %s26, 0
    %p213 = por %p211, %p212
    %p214 = scmp.ne.s32.totalorder %s202, %s203
    %p215 = scmp.eq.s32.totalorder %s27, 3
    %p216 = por %p214, %p215
    %p218 = scmp.ne.s32.totalorder %s203, %s217
    %p219 = scmp.eq.s32.totalorder %s27, 0
    %p220 = por %p218, %p219
    %s222 = sadd.s32 %s221, 1
    %p225 = scmp.eq.s32.totalorder %s21, 3
    %p226 = scmp.ne.s32.totalorder %s221, %s223
    %p227 = scmp.eq.s32.totalorder %s21, 0
    %p228 = por %p226, %p227
    %p229 = scmp.ne.s32.totalorder %s221, %s223
    %p230 = scmp.eq.s32.totalorder %s26, 3
    %p231 = por %p229, %p230
    %p232 = scmp.ne.s32.totalorder %s223, %s224
    %p233 = scmp.eq.s32.totalorder %s26, 0
    %p234 = por %p232, %p233
    %p235 = scmp.ne.s32.totalorder %s223, %s224
    %p236 = scmp.eq.s32.totalorder %s27, 3
    %p237 = por %p235, %p236
    %p239 = scmp.ne.s32.totalorder %s224, %s238
    %p240 = scmp.eq.s32.totalorder %s27, 0
    %p241 = por %p239, %p240
    %s243 = sadd.s32 %s242, 1
    %p246 = scmp.eq.s32.totalorder %s21, 3
    %p247 = scmp.ne.s32.totalorder %s242, %s244
    %p248 = scmp.eq.s32.totalorder %s21, 0
    %p249 = por %p247, %p248
    %p250 = scmp.ne.s32.totalorder %s242, %s244
    %p251 = scmp.eq.s32.totalorder %s26, 3
    %p252 = por %p250, %p251
    %p253 = scmp.ne.s32.totalorder %s244, %s245
    %p254 = scmp.eq.s32.totalorder %s26, 0
    %p255 = por %p253, %p254
    %p256 = scmp.ne.s32.totalorder %s244, %s245
    %p257 = scmp.eq.s32.totalorder %s27, 3
    %p258 = por %p256, %p257
    %p260 = scmp.ne.s32.totalorder %s245, %s259
    %p261 = scmp.eq.s32.totalorder %s27, 0
    %p262 = por %p260, %p261
    %s264 = sadd.s32 %s263, 1
    %p267 = scmp.eq.s32.totalorder %s21, 3
    %p268 = scmp.ne.s32.totalorder %s263, %s265
    %p269 = scmp.eq.s32.totalorder %s21, 0
    %p270 = por %p268, %p269
    %p271 = scmp.ne.s32.totalorder %s263, %s265
    %p272 = scmp.eq.s32.totalorder %s26, 3
    %p273 = por %p271, %p272
    %p274 = scmp.ne.s32.totalorder %s265, %s266
    %p275 = scmp.eq.s32.totalorder %s26, 0
    %p276 = por %p274, %p275
    %p277 = scmp.ne.s32.totalorder %s265, %s266
    %p278 = scmp.eq.s32.totalorder %s27, 3
    %p279 = por %p277, %p278
    %p281 = scmp.ne.s32.totalorder %s266, %s280
    %p282 = scmp.eq.s32.totalorder %s27, 0
    %p283 = por %p281, %p282
    %s285 = sadd.s32 %s284, 1
    %p288 = scmp.eq.s32.totalorder %s21, 3
    %p289 = scmp.ne.s32.totalorder %s284, %s286
    %p290 = scmp.eq.s32.totalorder %s21, 0
    %p291 = por %p289, %p290
    %p292 = scmp.ne.s32.totalorder %s284, %s286
    %p293 = scmp.eq.s32.totalorder %s26, 3
    %p294 = por %p292, %p293
    %p295 = scmp.ne.s32.totalorder %s286, %s287
    %p296 = scmp.eq.s32.totalorder %s26, 0
    %p297 = por %p295, %p296
    %p298 = scmp.ne.s32.totalorder %s286, %s287
    %p299 = scmp.eq.s32.totalorder %s27, 3
    %p300 = por %p298, %p299
    %p302 = scmp.ne.s32.totalorder %s287, %s301
    %p303 = scmp.eq.s32.totalorder %s27, 0
    %p304 = por %p302, %p303
    %s306 = sadd.s32 %s305, 1
    %p309 = scmp.eq.s32.totalorder %s21, 3
    %p310 = scmp.ne.s32.totalorder %s305, %s307
    %p311 = scmp.eq.s32.totalorder %s21, 0
    %p312 = por %p310, %p311
    %p313 = scmp.ne.s32.totalorder %s305, %s307
    %p314 = scmp.eq.s32.totalorder %s26, 3
    %p315 = por %p313, %p314
    %p316 = scmp.ne.s32.totalorder %s307, %s308
    %p317 = scmp.eq.s32.totalorder %s26, 0
    %p318 = por %p316, %p317
    %p319 = scmp.ne.s32.totalorder %s307, %s308
    %p320 = scmp.eq.s32.totalorder %s27, 3
    %p321 = por %p319, %p320
    %p323 = scmp.ne.s32.totalorder %s308, %s322
    %p324 = scmp.eq.s32.totalorder %s27, 0
    %p325 = por %p323, %p324
    %s327 = sadd.s32 %s326, 1
    %p330 = scmp.eq.s32.totalorder %s21, 3
    %p331 = scmp.ne.s32.totalorder %s326, %s328
    %p332 = scmp.eq.s32.totalorder %s21, 0
    %p333 = por %p331, %p332
    %p334 = scmp.ne.s32.totalorder %s326, %s328
    %p335 = scmp.eq.s32.totalorder %s26, 3
    %p336 = por %p334, %p335
    %p337 = scmp.ne.s32.totalorder %s328, %s329
    %p338 = scmp.eq.s32.totalorder %s26, 0
    %p339 = por %p337, %p338
    %p340 = scmp.ne.s32.totalorder %s328, %s329
    %p341 = scmp.eq.s32.totalorder %s27, 3
    %p342 = por %p340, %p341
    %p344 = scmp.ne.s32.totalorder %s329, %s343
    %p345 = scmp.eq.s32.totalorder %s27, 0
    %p346 = por %p344, %p345
    %s348 = sadd.s32 %s347, 1
    %p351 = scmp.eq.s32.totalorder %s21, 3
    %p352 = scmp.ne.s32.totalorder %s347, %s349
    %p353 = scmp.eq.s32.totalorder %s21, 0
    %p354 = por %p352, %p353
    %p355 = scmp.ne.s32.totalorder %s347, %s349
    %p356 = scmp.eq.s32.totalorder %s26, 3
    %p357 = por %p355, %p356
    %p358 = scmp.ne.s32.totalorder %s349, %s350
    %p359 = scmp.eq.s32.totalorder %s26, 0
    %p360 = por %p358, %p359
    %p361 = scmp.ne.s32.totalorder %s349, %s350
    %p362 = scmp.eq.s32.totalorder %s27, 3
    %p363 = por %p361, %p362
    %p365 = scmp.ne.s32.totalorder %s350, %s364
    %p366 = scmp.eq.s32.totalorder %s27, 0
    %p367 = por %p365, %p366
    %s369 = sadd.s32 %s368, 1
    %p372 = scmp.eq.s32.totalorder %s21, 3
    %p373 = scmp.ne.s32.totalorder %s368, %s370
    %p374 = scmp.eq.s32.totalorder %s21, 0
    %p375 = por %p373, %p374
    %p376 = scmp.ne.s32.totalorder %s368, %s370
    %p377 = scmp.eq.s32.totalorder %s26, 3
    %p378 = por %p376, %p377
    %p379 = scmp.ne.s32.totalorder %s370, %s371
    %p380 = scmp.eq.s32.totalorder %s26, 0
    %p381 = por %p379, %p380
    %p382 = scmp.ne.s32.totalorder %s370, %s371
    %p383 = scmp.eq.s32.totalorder %s27, 3
    %p384 = por %p382, %p383
    %p386 = scmp.ne.s32.totalorder %s371, %s385
    %p387 = scmp.eq.s32.totalorder %s27, 0
    %p388 = por %p386, %p387
    %s389 = ssub.s32 %s28, %s40
    %s390 = ssub.s32 %s29, %s36
    %s391 = sor.u32 %s389, %s390
    %p392 = scmp.eq.s32.totalorder %s391, 0
    %s394 = sadd.s32 %s393, 1
    %s395 = scalar_select %p392, %s393, %s394
    %p398 = pneg %p392
    %p399 = scmp.eq.s32.totalorder %s21, 3
    %p400 = por %p398, %p399
    %p401 = scmp.ne.s32.totalorder %s393, %s396
    %p402 = scmp.eq.s32.totalorder %s21, 0
    %p403 = por %p401, %p402
    %p404 = scmp.ne.s32.totalorder %s393, %s396
    %p405 = scmp.eq.s32.totalorder %s26, 3
    %p406 = por %p404, %p405
    %p407 = scmp.ne.s32.totalorder %s396, %s397
    %p408 = scmp.eq.s32.totalorder %s26, 0
    %p409 = por %p407, %p408
    %p410 = scmp.ne.s32.totalorder %s396, %s397
    %p411 = scmp.eq.s32.totalorder %s27, 3
    %p412 = por %p410, %p411
    %p414 = scmp.ne.s32.totalorder %s397, %s413
    %p415 = scmp.eq.s32.totalorder %s27, 0
    %p416 = por %p414, %p415
    %p417 = scmp.le.s32.totalorder 1, %s21
    %p418 = scmp.lt.s32.totalorder %s21, 5
    %p419 = pnand %p417, %p418
    %p420 = pneg %p419
    // Predicated region
    $region9: #{tpu_custom_call.1} parent=5 // pred_check
      _
    $region10: #{tpu_custom_call.1} parent=5 // pred_check_branch
      %422 = sbr.rel (%p419) target = $region12
    $region11: #{tpu_custom_call.1} parent=5 // pred_region
      %s423 = ssub.s32 %s21, 1
      // Predicated region
      $region13: #{tpu_custom_call.1} parent=11 // pred_check
        %p424 = pneg %p150
      $region14: #{tpu_custom_call.1} parent=11 // pred_check_branch
        %426 = sbr.rel (%p424) target = $region16
      $region15: #{tpu_custom_call.1} parent=11 // pred_region
        _
      $region16: #{tpu_custom_call.1} parent=11 // pred_fallthru
        _
      // Predicated region
      $region17: #{tpu_custom_call.1} parent=11 // pred_check
        %p427 = pneg %p171
      $region18: #{tpu_custom_call.1} parent=11 // pred_check_branch
        %429 = sbr.rel (%p427) target = $region20
      $region19: #{tpu_custom_call.1} parent=11 // pred_region
        _
      $region20: #{tpu_custom_call.1} parent=11 // pred_fallthru
        _
      // Predicated region
      $region21: #{tpu_custom_call.1} parent=11 // pred_check
        %p430 = pneg %p192
      $region22: #{tpu_custom_call.1} parent=11 // pred_check_branch
        %432 = sbr.rel (%p430) target = $region24
      $region23: #{tpu_custom_call.1} parent=11 // pred_region
        _
      $region24: #{tpu_custom_call.1} parent=11 // pred_fallthru
        _
      // Predicated region
      $region25: #{tpu_custom_call.1} parent=11 // pred_check
        %p433 = pneg %p213
      $region26: #{tpu_custom_call.1} parent=11 // pred_check_branch
        %435 = sbr.rel (%p433) target = $region28
      $region27: #{tpu_custom_call.1} parent=11 // pred_region
        _
      $region28: #{tpu_custom_call.1} parent=11 // pred_fallthru
        _
      // Predicated region
      $region29: #{tpu_custom_call.1} parent=11 // pred_check
        %p436 = pneg %p234
      $region30: #{tpu_custom_call.1} parent=11 // pred_check_branch
        %438 = sbr.rel (%p436) target = $region32
      $region31: #{tpu_custom_call.1} parent=11 // pred_region
        _
      $region32: #{tpu_custom_call.1} parent=11 // pred_fallthru
        _
      // Predicated region
      $region33: #{tpu_custom_call.1} parent=11 // pred_check
        %p439 = pneg %p255
      $region34: #{tpu_custom_call.1} parent=11 // pred_check_branch
        %441 = sbr.rel (%p439) target = $region36
      $region35: #{tpu_custom_call.1} parent=11 // pred_region
        _
      $region36: #{tpu_custom_call.1} parent=11 // pred_fallthru
        _
      // Predicated region
      $region37: #{tpu_custom_call.1} parent=11 // pred_check
        %p442 = pneg %p276
      $region38: #{tpu_custom_call.1} parent=11 // pred_check_branch
        %444 = sbr.rel (%p442) target = $region40
      $region39: #{tpu_custom_call.1} parent=11 // pred_region
        _
      $region40: #{tpu_custom_call.1} parent=11 // pred_fallthru
        _
      // Predicated region
      $region41: #{tpu_custom_call.1} parent=11 // pred_check
        %p445 = pneg %p297
      $region42: #{tpu_custom_call.1} parent=11 // pred_check_branch
        %447 = sbr.rel (%p445) target = $region44
      $region43: #{tpu_custom_call.1} parent=11 // pred_region
        _
      $region44: #{tpu_custom_call.1} parent=11 // pred_fallthru
        _
      // Predicated region
      $region45: #{tpu_custom_call.1} parent=11 // pred_check
        %p448 = pneg %p318
      $region46: #{tpu_custom_call.1} parent=11 // pred_check_branch
        %450 = sbr.rel (%p448) target = $region48
      $region47: #{tpu_custom_call.1} parent=11 // pred_region
        _
      $region48: #{tpu_custom_call.1} parent=11 // pred_fallthru
        _
      // Predicated region
      $region49: #{tpu_custom_call.1} parent=11 // pred_check
        %p451 = pneg %p339
      $region50: #{tpu_custom_call.1} parent=11 // pred_check_branch
        %453 = sbr.rel (%p451) target = $region52
      $region51: #{tpu_custom_call.1} parent=11 // pred_region
        _
      $region52: #{tpu_custom_call.1} parent=11 // pred_fallthru
        _
      // Predicated region
      $region53: #{tpu_custom_call.1} parent=11 // pred_check
        %p454 = pneg %p360
      $region54: #{tpu_custom_call.1} parent=11 // pred_check_branch
        %456 = sbr.rel (%p454) target = $region56
      $region55: #{tpu_custom_call.1} parent=11 // pred_region
        _
      $region56: #{tpu_custom_call.1} parent=11 // pred_fallthru
        _
      // Predicated region
      $region57: #{tpu_custom_call.1} parent=11 // pred_check
        %p457 = pneg %p381
      $region58: #{tpu_custom_call.1} parent=11 // pred_check_branch
        %459 = sbr.rel (%p457) target = $region60
      $region59: #{tpu_custom_call.1} parent=11 // pred_region
        _
      $region60: #{tpu_custom_call.1} parent=11 // pred_fallthru
        _
    $region12: #{tpu_custom_call.1} parent=5 // pred_fallthru
      _
    %p460 = scmp.lt.s32.totalorder %s21, 4
    // Predicated region
    $region61: #{tpu_custom_call.1} parent=5 // pred_check
      %p461 = pneg %p460
    $region62: #{tpu_custom_call.1} parent=5 // pred_check_branch
      %463 = sbr.rel (%p461) target = $region64
    $region63: #{tpu_custom_call.1} parent=5 // pred_region
      // Predicated region
      $region65: #{tpu_custom_call.1} parent=63 // pred_check
        %p464 = pneg %p55
      $region66: #{tpu_custom_call.1} parent=63 // pred_check_branch
        %466 = sbr.rel (%p464) target = $region68
      $region67: #{tpu_custom_call.1} parent=63 // pred_region
        %p467 = scmp.lt.s32.totalorder %s28, 1
        %s468 = scalar_select %p467, %s28, 1
        %p469 = scmp.lt.s32.totalorder %s29, 1
        %s470 = scalar_select %p469, %s29, 1
        %s471 = smul.addr %s468, 2
        %s472 = sadd.s32 %s470, %s471
        %s473 = smul.addr %s472, 8
        %s474 = scalar_lea.vmem %s0, %s473
      $region68: #{tpu_custom_call.1} parent=63 // pred_fallthru
        _
      // Predicated region
      $region69: #{tpu_custom_call.1} parent=63 // pred_check
        %p475 = pneg %p89
      $region70: #{tpu_custom_call.1} parent=63 // pred_check_branch
        %477 = sbr.rel (%p475) target = $region72
      $region71: #{tpu_custom_call.1} parent=63 // pred_region
        %s478 = ssub.s32 %s29, 1
        %p479 = scmp.gt.s32.totalorder %s478, 0
        %s480 = scalar_select %p479, %s478, 0
        %p481 = scmp.lt.s32.totalorder %s28, 1
        %s482 = scalar_select %p481, %s28, 1
        %p483 = scmp.lt.s32.totalorder %s480, 1
        %s484 = scalar_select %p483, %s480, 1
        %s485 = smul.addr %s482, 2
        %s486 = sadd.s32 %s484, %s485
        %s487 = smul.addr %s486, 8
        %s488 = scalar_lea.vmem %s1, %s487
        %s489 = ssub.s32 %s29, 1
        %p490 = scmp.gt.s32.totalorder %s489, 0
        %s491 = scalar_select %p490, %s489, 0
      $region72: #{tpu_custom_call.1} parent=63 // pred_fallthru
        _
      // Predicated region
      $region73: #{tpu_custom_call.1} parent=63 // pred_check
        %p492 = pneg %p123
      $region74: #{tpu_custom_call.1} parent=63 // pred_check_branch
        %494 = sbr.rel (%p492) target = $region76
      $region75: #{tpu_custom_call.1} parent=63 // pred_region
        %s495 = sadd.s32 %s29, 1
        %p496 = scmp.lt.s32.totalorder %s495, 1
        %s497 = scalar_select %p496, %s495, 1
        %p498 = scmp.lt.s32.totalorder %s28, 1
        %s499 = scalar_select %p498, %s28, 1
        %p500 = scmp.lt.s32.totalorder %s497, 1
        %s501 = scalar_select %p500, %s497, 1
        %s502 = smul.addr %s499, 2
        %s503 = sadd.s32 %s501, %s502
        %s504 = smul.addr %s503, 8
        %s505 = scalar_lea.vmem %s2, %s504
        %s506 = sadd.s32 %s29, 1
        %p507 = scmp.lt.s32.totalorder %s506, 1
        %s508 = scalar_select %p507, %s506, 1
      $region76: #{tpu_custom_call.1} parent=63 // pred_fallthru
        _
    $region64: #{tpu_custom_call.1} parent=5 // pred_fallthru
      _
    %p509 = scmp.le.s32.totalorder 1, %s21
    %p510 = scmp.lt.s32.totalorder %s21, 5
    %p511 = pnand %p509, %p510
    %p512 = pneg %p511
    // Predicated region
    $region77: #{tpu_custom_call.1} parent=5 // pred_check
      _
    $region78: #{tpu_custom_call.1} parent=5 // pred_check_branch
      %514 = sbr.rel (%p511) target = $region80
    $region79: #{tpu_custom_call.1} parent=5 // pred_region
      %s515 = ssub.s32 %s21, 1
      %p516 = scmp.lt.s32.totalorder %s30, 1
      %s517 = scalar_select %p516, %s30, 1
      %p518 = scmp.lt.s32.totalorder %s31, 1
      %s519 = scalar_select %p518, %s31, 1
      %s520 = smul.addr %s517, 2
      %s521 = sadd.s32 %s519, %s520
      %s522 = smul.addr %s521, 8
      %s523 = scalar_lea.vmem %s0, %s522
      %p524 = pneg %p61
      %p525 = pneg %p58
      %s526 = ssub.s32 %s31, 1
      %p527 = scmp.gt.s32.totalorder %s526, 0
      %s528 = scalar_select %p527, %s526, 0
      %p529 = scmp.lt.s32.totalorder %s30, 1
      %s530 = scalar_select %p529, %s30, 1
      %p531 = scmp.lt.s32.totalorder %s528, 1
      %s532 = scalar_select %p531, %s528, 1
      %s533 = smul.addr %s530, 2
      %s534 = sadd.s32 %s532, %s533
      %s535 = smul.addr %s534, 8
      %s536 = scalar_lea.vmem %s1, %s535
      %p537 = pneg %p95
      %p538 = pneg %p92
      %s539 = sadd.s32 %s31, 1
      %p540 = scmp.lt.s32.totalorder %s539, 1
      %s541 = scalar_select %p540, %s539, 1
      %p542 = scmp.lt.s32.totalorder %s30, 1
      %s543 = scalar_select %p542, %s30, 1
      %p544 = scmp.lt.s32.totalorder %s541, 1
      %s545 = scalar_select %p544, %s541, 1
      %s546 = smul.addr %s543, 2
      %s547 = sadd.s32 %s545, %s546
      %s548 = smul.addr %s547, 8
      %s549 = scalar_lea.vmem %s2, %s548
      %p550 = pneg %p129
      %p551 = pneg %p126
      %p552 = pneg %p150
      %p553 = pneg %p147
      %p554 = pneg %p171
      %p555 = pneg %p168
      %p556 = pneg %p192
      %p557 = pneg %p189
      %p558 = pneg %p213
      %p559 = pneg %p210
      %p560 = pneg %p234
      %p561 = pneg %p231
      %p562 = pneg %p255
      %p563 = pneg %p252
      %p564 = pneg %p276
      %p565 = pneg %p273
      %p566 = pneg %p297
      %p567 = pneg %p294
      %p568 = pneg %p318
      %p569 = pneg %p315
      %p570 = pneg %p339
      %p571 = pneg %p336
      %p572 = pneg %p360
      %p573 = pneg %p357
      %p574 = pneg %p381
      %p575 = pneg %p378
      %p576 = pneg %p409
      %p577 = pneg %p406
      %p578 = scmp.lt.s32.totalorder %s30, 1
      %s579 = scalar_select %p578, %s30, 1
      %p580 = scmp.lt.s32.totalorder %s31, 1
      %s581 = scalar_select %p580, %s31, 1
      %s582 = smul.addr %s579, 2
      %s583 = sadd.s32 %s581, %s582
      %s584 = smul.addr %s583, 8
      %s585 = scalar_lea.vmem %s15, %s584
      %p586 = scmp.lt.s32.totalorder %s30, 1
      %s587 = scalar_select %p586, %s30, 1
      %p588 = scmp.lt.s32.totalorder %s31, 1
      %s589 = scalar_select %p588, %s31, 1
      %s590 = smul.addr %s587, 2
      %s591 = sadd.s32 %s589, %s590
      %s592 = smul.addr %s591, 8
      %s593 = scalar_lea.vmem %s0, %s592
      %s594 = ssub.s32 %s31, 1
      %p595 = scmp.gt.s32.totalorder %s594, 0
      %s596 = scalar_select %p595, %s594, 0
      %p597 = scmp.lt.s32.totalorder %s30, 1
      %s598 = scalar_select %p597, %s30, 1
      %p599 = scmp.lt.s32.totalorder %s596, 1
      %s600 = scalar_select %p599, %s596, 1
      %s601 = smul.addr %s598, 2
      %s602 = sadd.s32 %s600, %s601
      %s603 = smul.addr %s602, 8
      %s604 = scalar_lea.vmem %s1, %s603
      %s605 = ssub.s32 %s31, 1
      %p606 = scmp.gt.s32.totalorder %s605, 0
      %s607 = scalar_select %p606, %s605, 0
      %s608 = sadd.s32 %s31, 1
      %p609 = scmp.lt.s32.totalorder %s608, 1
      %s610 = scalar_select %p609, %s608, 1
      %p611 = scmp.lt.s32.totalorder %s30, 1
      %s612 = scalar_select %p611, %s30, 1
      %p613 = scmp.lt.s32.totalorder %s610, 1
      %s614 = scalar_select %p613, %s610, 1
      %s615 = smul.addr %s612, 2
      %s616 = sadd.s32 %s614, %s615
      %s617 = smul.addr %s616, 8
      %s618 = scalar_lea.vmem %s2, %s617
      %s619 = sadd.s32 %s31, 1
      %p620 = scmp.lt.s32.totalorder %s619, 1
      %s621 = scalar_select %p620, %s619, 1
      %p622 = scmp.lt.s32.totalorder %s30, 1
      %s623 = scalar_select %p622, %s30, 1
      %p624 = scmp.lt.s32.totalorder %s31, 1
      %s625 = scalar_select %p624, %s31, 1
      %s626 = smul.addr %s623, 2
      %s627 = sadd.s32 %s625, %s626
      %s628 = smul.addr %s627, 8
      %s629 = scalar_lea.vmem %s15, %s628
      %v630 = vld [vmem:[%s604] sm:$0xff]
      %v631 = vld [vmem:[%s593] sm:$0xff]
      %v632 = vld [vmem:[%s618] sm:$0xff]
      %s633 = smul.u32 %s31, 8
      %s634 = ssub.s32 %s633, 8
      %v635 = vlaneseq
      %v636 = vshrl.u32 %v635, 7
      %v637 = vadd.s32 %v636, 8
      %v638 = vadd.s32 %v636, 16
      %v639 = vstv %s634
      %v640 = vadd.s32 %v639, %v636
      %v641 = vadd.s32 %v639, %v637
      %v642 = vadd.s32 %v639, %v638
      %vm643 = vcmp.ge.s32.totalorder %v640, 0
      %vm644 = vcmp.ge.s32.totalorder %v641, 0
      %vm645 = vcmp.ge.s32.totalorder %v642, 0
      %vm646 = vcmp.lt.s32.totalorder %v640, 16
      %vm647 = vcmp.lt.s32.totalorder %v641, 16
      %vm648 = vcmp.lt.s32.totalorder %v642, 16
      %vm649 = vmand %vm643, %vm646
      %vm650 = vmand %vm644, %vm647
      %vm651 = vmand %vm645, %vm648
      %v652 = vsel %vm649, 1, 0
      %v653 = vsel %vm650, 1, 0
      %v654 = vsel %vm651, 1, 0
      %vm655 = vcmp.eq.s32.totalorder %v652, 1
      %vm656 = vcmp.eq.s32.totalorder %v653, 1
      %vm657 = vcmp.eq.s32.totalorder %v654, 1
      %v658 = vsel %vm655, %v630, 0.0
      %v659 = vsel %vm656, %v631, 0.0
      %v660 = vsel %vm657, %v632, 0.0
      %v661 = vld [vmem:[%s3] sm:$0xf]
      %s662 = scalar_lea.vmem %s3, 4
      %v663 = vld [vmem:[%s662] sm:$0xf]
      %vm667 = vcmask 1046528
      %v668 = vrot.slane %v658, 1
      %v669 = vrot.slane %v659, 1
      %v670 = vsel %vm667, %v668, %v669
      %v671 = vrot.slane %v660, 1
      %v672 = vsel %vm667, %v669, %v671
      %vm673 = vcmask 31744
      %v674 = vsel %vm673, %v670, 0
      %v676 = vsel %vm673, %v672, 0
      %v678 = vsel %vm673, %v671, 0
      %vm680 = vcmask 1043456
      %v682 = vsel %vm680, %v663, 0
      %684 = vmatprep.subr.mxu0 0.0
      %685 = vmatpush1.msra.mxu0 %v682
      %686 = vmatprep.subr.mxu0 0.0
      %687 = vmatpush1.msra.mxu0 0.0
      %688 = vmatprep.subr.mxu0 0.0
      %689 = vmatpush1.msra.mxu0 0.0
      %690 = vmatprep.subr.mxu0 0.0
      %691 = vmatpush1.msra.mxu0 0.0
      %692 = vmatprep.subr.mxu0 0.0
      %693 = vmatpush1.msra.mxu0 0.0
      %694 = vmatprep.subr.mxu0 0.0
      %695 = vmatpush1.msra.mxu0 0.0
      %696 = vmatprep.subr.mxu0 0.0
      %697 = vmatpush1.msra.mxu0 0.0
      %698 = vmatprep.subr.mxu0 0.0
      %699 = vmatpush1.msra.mxu0 0.0
      %700 = vmatprep.subr.mxu0 0.0
      %701 = vmatpush1.msra.mxu0 0.0
      %702 = vmatprep.subr.mxu0 0.0
      %703 = vmatpush1.msra.mxu0 0.0
      %704 = vmatprep.subr.mxu0 0.0
      %705 = vmatpush1.msra.mxu0 0.0
      %706 = vmatprep.subr.mxu0 0.0
      %707 = vmatpush1.msra.mxu0 0.0
      %708 = vmatprep.subr.mxu0 0.0
      %709 = vmatpush1.msra.mxu0 0.0
      %710 = vmatprep.subr.mxu0 0.0
      %711 = vmatpush1.msra.mxu0 0.0
      %712 = vmatprep.subr.mxu0 0.0
      %713 = vmatpush1.msra.mxu0 0.0
      %714 = vmatprep.subr.mxu0 0.0
      %715 = vmatpush1.msra.mxu0 0.0
      %716 = vmatprep.subr.mxu0 0.0
      %717 = vmatpush1.msra.mxu0 0.0
      %718 = vmatprep.subr.mxu0 0.0
      %719 = vmatpush1.msra.mxu0 0.0
      %720 = vmatprep.subr.mxu0 0.0
      %721 = vmatpush1.msra.mxu0 0.0
      %722 = vmatprep.subr.mxu0 0.0
      %723 = vmatpush1.msra.mxu0 0.0
      %724 = vmatprep.subr.mxu0 0.0
      %725 = vmatpush1.msra.mxu0 0.0
      %726 = vmatprep.subr.mxu0 0.0
      %727 = vmatpush1.msra.mxu0 0.0
      %728 = vmatprep.subr.mxu0 0.0
      %729 = vmatpush1.msra.mxu0 0.0
      %730 = vmatprep.subr.mxu0 0.0
      %731 = vmatpush1.msra.mxu0 0.0
      %732 = vmatprep.subr.mxu0 0.0
      %733 = vmatpush1.msra.mxu0 0.0
      %734 = vmatprep.subr.mxu0 0.0
      %735 = vmatpush1.msra.mxu0 0.0
      %736 = vmatprep.subr.mxu0 0.0
      %737 = vmatpush1.msra.mxu0 0.0
      %738 = vmatprep.subr.mxu0 0.0
      %739 = vmatpush1.msra.mxu0 0.0
      %740 = vmatprep.subr.mxu0 0.0
      %741 = vmatpush1.msra.mxu0 0.0
      %742 = vmatprep.subr.mxu0 0.0
      %743 = vmatpush1.msra.mxu0 0.0
      %744 = vmatprep.subr.mxu0 0.0
      %745 = vmatpush1.msra.mxu0 0.0
      %746 = vmatprep.subr.mxu0 0.0
      %747 = vmatpush1.msra.mxu0 0.0
      %748 = vmatprep.mubr.f32.mxu0 0.0
      %749 = vmatmul.mubr.f32.gmra.mrb[0].mxu0 %v674
      %v750 = vpop.f32.mrb[0].mxu0
      %v751 = vadd.f32 0.0, %v750
      %v752 = vpop.f32.mrb[0].mxu0
      %753 = vmatprep.mubr.f32.mxu0 0.0
      %754 = vmatmul.mubr.f32.gmra.mrb[0].mxu0 %v676
      %v755 = vpop.f32.mrb[0].mxu0
      %v756 = vadd.f32 0.0, %v755
      %v757 = vpop.f32.mrb[0].mxu0
      %758 = vmatprep.mubr.f32.mxu0 0.0
      %759 = vmatmul.mubr.f32.gmra.mrb[0].mxu0 %v678
      %v760 = vpop.f32.mrb[0].mxu0
      %v761 = vadd.f32 0.0, %v760
      %v762 = vpop.f32.mrb[0].mxu0
      %763 = vdwg.mxu0
      %v764 = vsel %vm673, %v658, 0
      %v766 = vsel %vm673, %v659, 0
      %v768 = vsel %vm673, %v660, 0
      %v771 = vsel %vm680, %v661, 0
      %773 = vmatprep.subr.mxu0 0.0
      %774 = vmatpush1.msra.mxu0 %v771
      %775 = vmatprep.subr.mxu0 0.0
      %776 = vmatpush1.msra.mxu0 0.0
      %777 = vmatprep.subr.mxu0 0.0
      %778 = vmatpush1.msra.mxu0 0.0
      %779 = vmatprep.subr.mxu0 0.0
      %780 = vmatpush1.msra.mxu0 0.0
      %781 = vmatprep.subr.mxu0 0.0
      %782 = vmatpush1.msra.mxu0 0.0
      %783 = vmatprep.subr.mxu0 0.0
      %784 = vmatpush1.msra.mxu0 0.0
      %785 = vmatprep.subr.mxu0 0.0
      %786 = vmatpush1.msra.mxu0 0.0
      %787 = vmatprep.subr.mxu0 0.0
      %788 = vmatpush1.msra.mxu0 0.0
      %789 = vmatprep.subr.mxu0 0.0
      %790 = vmatpush1.msra.mxu0 0.0
      %791 = vmatprep.subr.mxu0 0.0
      %792 = vmatpush1.msra.mxu0 0.0
      %793 = vmatprep.subr.mxu0 0.0
      %794 = vmatpush1.msra.mxu0 0.0
      %795 = vmatprep.subr.mxu0 0.0
      %796 = vmatpush1.msra.mxu0 0.0
      %797 = vmatprep.subr.mxu0 0.0
      %798 = vmatpush1.msra.mxu0 0.0
      %799 = vmatprep.subr.mxu0 0.0
      %800 = vmatpush1.msra.mxu0 0.0
      %801 = vmatprep.subr.mxu0 0.0
      %802 = vmatpush1.msra.mxu0 0.0
      %803 = vmatprep.subr.mxu0 0.0
      %804 = vmatpush1.msra.mxu0 0.0
      %805 = vmatprep.subr.mxu0 0.0
      %806 = vmatpush1.msra.mxu0 0.0
      %807 = vmatprep.subr.mxu0 0.0
      %808 = vmatpush1.msra.mxu0 0.0
      %809 = vmatprep.subr.mxu0 0.0
      %810 = vmatpush1.msra.mxu0 0.0
      %811 = vmatprep.subr.mxu0 0.0
      %812 = vmatpush1.msra.mxu0 0.0
      %813 = vmatprep.subr.mxu0 0.0
      %814 = vmatpush1.msra.mxu0 0.0
      %815 = vmatprep.subr.mxu0 0.0
      %816 = vmatpush1.msra.mxu0 0.0
      %817 = vmatprep.subr.mxu0 0.0
      %818 = vmatpush1.msra.mxu0 0.0
      %819 = vmatprep.subr.mxu0 0.0
      %820 = vmatpush1.msra.mxu0 0.0
      %821 = vmatprep.subr.mxu0 0.0
      %822 = vmatpush1.msra.mxu0 0.0
      %823 = vmatprep.subr.mxu0 0.0
      %824 = vmatpush1.msra.mxu0 0.0
      %825 = vmatprep.subr.mxu0 0.0
      %826 = vmatpush1.msra.mxu0 0.0
      %827 = vmatprep.subr.mxu0 0.0
      %828 = vmatpush1.msra.mxu0 0.0
      %829 = vmatprep.subr.mxu0 0.0
      %830 = vmatpush1.msra.mxu0 0.0
      %831 = vmatprep.subr.mxu0 0.0
      %832 = vmatpush1.msra.mxu0 0.0
      %833 = vmatprep.subr.mxu0 0.0
      %834 = vmatpush1.msra.mxu0 0.0
      %835 = vmatprep.subr.mxu0 0.0
      %836 = vmatpush1.msra.mxu0 0.0
      %837 = vmatprep.mubr.f32.mxu0 0.0
      %838 = vmatmul.mubr.f32.gmra.mrb[0].mxu0 %v764
      %v839 = vpop.f32.mrb[0].mxu0
      %v840 = vadd.f32 %v751, %v839
      %v841 = vpop.f32.mrb[0].mxu0
      %842 = vmatprep.mubr.f32.mxu0 0.0
      %843 = vmatmul.mubr.f32.gmra.mrb[0].mxu0 %v766
      %v844 = vpop.f32.mrb[0].mxu0
      %v845 = vadd.f32 %v756, %v844
      %v846 = vpop.f32.mrb[0].mxu0
      %847 = vmatprep.mubr.f32.mxu0 0.0
      %848 = vmatmul.mubr.f32.gmra.mrb[0].mxu0 %v768
      %v849 = vpop.f32.mrb[0].mxu0
      %v850 = vadd.f32 %v761, %v849
      %v851 = vpop.f32.mrb[0].mxu0
      %852 = vdwg.mxu0
      %s853 = scalar_lea.vmem %s3, 8
      %v854 = vld [vmem:[%s853] sm:$0xf]
      %vm855 = vcmask 1045504
      %v856 = vrot.slane %v658, 2
      %v857 = vrot.slane %v659, 2
      %v858 = vsel %vm855, %v856, %v857
      %v859 = vrot.slane %v660, 2
      %v860 = vsel %vm855, %v857, %v859
      %v861 = vsel %vm673, %v858, 0
      %v863 = vsel %vm673, %v860, 0
      %v865 = vsel %vm673, %v859, 0
      %v868 = vsel %vm680, %v854, 0
      %870 = vmatprep.subr.mxu0 0.0
      %871 = vmatpush1.msra.mxu0 %v868
      %872 = vmatprep.subr.mxu0 0.0
      %873 = vmatpush1.msra.mxu0 0.0
      %874 = vmatprep.subr.mxu0 0.0
      %875 = vmatpush1.msra.mxu0 0.0
      %876 = vmatprep.subr.mxu0 0.0
      %877 = vmatpush1.msra.mxu0 0.0
      %878 = vmatprep.subr.mxu0 0.0
      %879 = vmatpush1.msra.mxu0 0.0
      %880 = vmatprep.subr.mxu0 0.0
      %881 = vmatpush1.msra.mxu0 0.0
      %882 = vmatprep.subr.mxu0 0.0
      %883 = vmatpush1.msra.mxu0 0.0
      %884 = vmatprep.subr.mxu0 0.0
      %885 = vmatpush1.msra.mxu0 0.0
      %886 = vmatprep.subr.mxu0 0.0
      %887 = vmatpush1.msra.mxu0 0.0
      %888 = vmatprep.subr.mxu0 0.0
      %889 = vmatpush1.msra.mxu0 0.0
      %890 = vmatprep.subr.mxu0 0.0
      %891 = vmatpush1.msra.mxu0 0.0
      %892 = vmatprep.subr.mxu0 0.0
      %893 = vmatpush1.msra.mxu0 0.0
      %894 = vmatprep.subr.mxu0 0.0
      %895 = vmatpush1.msra.mxu0 0.0
      %896 = vmatprep.subr.mxu0 0.0
      %897 = vmatpush1.msra.mxu0 0.0
      %898 = vmatprep.subr.mxu0 0.0
      %899 = vmatpush1.msra.mxu0 0.0
      %900 = vmatprep.subr.mxu0 0.0
      %901 = vmatpush1.msra.mxu0 0.0
      %902 = vmatprep.subr.mxu0 0.0
      %903 = vmatpush1.msra.mxu0 0.0
      %904 = vmatprep.subr.mxu0 0.0
      %905 = vmatpush1.msra.mxu0 0.0
      %906 = vmatprep.subr.mxu0 0.0
      %907 = vmatpush1.msra.mxu0 0.0
      %908 = vmatprep.subr.mxu0 0.0
      %909 = vmatpush1.msra.mxu0 0.0
      %910 = vmatprep.subr.mxu0 0.0
      %911 = vmatpush1.msra.mxu0 0.0
      %912 = vmatprep.subr.mxu0 0.0
      %913 = vmatpush1.msra.mxu0 0.0
      %914 = vmatprep.subr.mxu0 0.0
      %915 = vmatpush1.msra.mxu0 0.0
      %916 = vmatprep.subr.mxu0 0.0
      %917 = vmatpush1.msra.mxu0 0.0
      %918 = vmatprep.subr.mxu0 0.0
      %919 = vmatpush1.msra.mxu0 0.0
      %920 = vmatprep.subr.mxu0 0.0
      %921 = vmatpush1.msra.mxu0 0.0
      %922 = vmatprep.subr.mxu0 0.0
      %923 = vmatpush1.msra.mxu0 0.0
      %924 = vmatprep.subr.mxu0 0.0
      %925 = vmatpush1.msra.mxu0 0.0
      %926 = vmatprep.subr.mxu0 0.0
      %927 = vmatpush1.msra.mxu0 0.0
      %928 = vmatprep.subr.mxu0 0.0
      %929 = vmatpush1.msra.mxu0 0.0
      %930 = vmatprep.subr.mxu0 0.0
      %931 = vmatpush1.msra.mxu0 0.0
      %932 = vmatprep.subr.mxu0 0.0
      %933 = vmatpush1.msra.mxu0 0.0
      %934 = vmatprep.mubr.f32.mxu0 0.0
      %935 = vmatmul.mubr.f32.gmra.mrb[0].mxu0 %v861
      %v936 = vpop.f32.mrb[0].mxu0
      %v937 = vadd.f32 0.0, %v936
      %v938 = vpop.f32.mrb[0].mxu0
      %939 = vmatprep.mubr.f32.mxu0 0.0
      %940 = vmatmul.mubr.f32.gmra.mrb[0].mxu0 %v863
      %v941 = vpop.f32.mrb[0].mxu0
      %v942 = vadd.f32 0.0, %v941
      %v943 = vpop.f32.mrb[0].mxu0
      %944 = vmatprep.mubr.f32.mxu0 0.0
      %945 = vmatmul.mubr.f32.gmra.mrb[0].mxu0 %v865
      %v946 = vpop.f32.mrb[0].mxu0
      %v947 = vadd.f32 0.0, %v946
      %v948 = vpop.f32.mrb[0].mxu0
      %949 = vdwg.mxu0
      %v950 = vadd.f32 %v840, %v937
      %v951 = vadd.f32 %v845, %v942
      %v952 = vadd.f32 %v850, %v947
      %v953 = vld [vmem:[%s4] sm:$0x1]
      %v955 = vlaneseq
      %v956 = vshrl.u32 %v955, 7
      %v957 = vsub.s32 0, %v956
      %v958 = vrot.slane %v953, %v957
      %v960 = vmul.f32 %v950, %v958
      %v961 = vmul.f32 %v951, %v958
      %v962 = vmul.f32 %v952, %v958
      %v963 = vld [vmem:[%s5] sm:$0x1]
      %v965 = vlaneseq
      %v966 = vshrl.u32 %v965, 7
      %v967 = vsub.s32 0, %v966
      %v968 = vrot.slane %v963, %v967
      %v970 = vadd.f32 %v960, %v968
      %v971 = vadd.f32 %v961, %v968
      %v972 = vadd.f32 %v962, %v968
      %v973 = vmax.f32 %v970, 0.0
      %v974 = vmax.f32 %v971, 0.0
      %v975 = vmax.f32 %v972, 0.0
      %s976 = ssub.s32 %s633, 7
      %v977 = vstv %s976
      %v978 = vadd.s32 %v977, %v636
      %v979 = vadd.s32 %v977, %v637
      %v980 = vadd.s32 %v977, %v638
      %vm981 = vcmp.ge.s32.totalorder %v978, 0
      %vm982 = vcmp.ge.s32.totalorder %v979, 0
      %vm983 = vcmp.ge.s32.totalorder %v980, 0
      %vm984 = vcmp.lt.s32.totalorder %v978, 16
      %vm985 = vcmp.lt.s32.totalorder %v979, 16
      %vm986 = vcmp.lt.s32.totalorder %v980, 16
      %vm987 = vmand %vm981, %vm984
      %vm988 = vmand %vm982, %vm985
      %vm989 = vmand %vm983, %vm986
      %v990 = vsel %vm987, 1, 0
      %v991 = vsel %vm988, 1, 0
      %v992 = vsel %vm989, 1, 0
      %vm993 = vcmp.eq.s32.totalorder %v990, 1
      %vm994 = vcmp.eq.s32.totalorder %v991, 1
      %vm995 = vcmp.eq.s32.totalorder %v992, 1
      %v996 = vsel %vm993, %v973, 0.0
      %v997 = vsel %vm994, %v974, 0.0
      %v998 = vsel %vm995, %v975, 0.0
      %v999 = vld [vmem:[%s6] sm:$0xff]
      %s1000 = scalar_lea.vmem %s6, 8
      %v1001 = vld [vmem:[%s1000] sm:$0xff]
      %v1005 = vrot.slane %v996, 1
      %v1006 = vrot.slane %v997, 1
      %v1007 = vsel %vm667, %v1005, %v1006
      %v1008 = vrot.slane %v998, 1
      %v1009 = vsel %vm667, %v1006, %v1008
      %vm1010 = vcmask 64512
      %v1011 = vsel %vm1010, %v1007, 0
      %v1013 = vsel %vm1010, %v1009, 0
      %v1015 = vsel %vm1010, %v1008, 0
      %1017 = vmatprep.subr.mxu0 0.0
      %1018 = vmatpush1.msra.mxu0 %v1001
      %1019 = vmatprep.subr.mxu0 0.0
      %1020 = vmatpush1.msra.mxu0 0.0
      %1021 = vmatprep.subr.mxu0 0.0
      %1022 = vmatpush1.msra.mxu0 0.0
      %1023 = vmatprep.subr.mxu0 0.0
      %1024 = vmatpush1.msra.mxu0 0.0
      %1025 = vmatprep.subr.mxu0 0.0
      %1026 = vmatpush1.msra.mxu0 0.0
      %1027 = vmatprep.subr.mxu0 0.0
      %1028 = vmatpush1.msra.mxu0 0.0
      %1029 = vmatprep.subr.mxu0 0.0
      %1030 = vmatpush1.msra.mxu0 0.0
      %1031 = vmatprep.subr.mxu0 0.0
      %1032 = vmatpush1.msra.mxu0 0.0
      %1033 = vmatprep.subr.mxu0 0.0
      %1034 = vmatpush1.msra.mxu0 0.0
      %1035 = vmatprep.subr.mxu0 0.0
      %1036 = vmatpush1.msra.mxu0 0.0
      %1037 = vmatprep.subr.mxu0 0.0
      %1038 = vmatpush1.msra.mxu0 0.0
      %1039 = vmatprep.subr.mxu0 0.0
      %1040 = vmatpush1.msra.mxu0 0.0
      %1041 = vmatprep.subr.mxu0 0.0
      %1042 = vmatpush1.msra.mxu0 0.0
      %1043 = vmatprep.subr.mxu0 0.0
      %1044 = vmatpush1.msra.mxu0 0.0
      %1045 = vmatprep.subr.mxu0 0.0
      %1046 = vmatpush1.msra.mxu0 0.0
      %1047 = vmatprep.subr.mxu0 0.0
      %1048 = vmatpush1.msra.mxu0 0.0
      %1049 = vmatprep.subr.mxu0 0.0
      %1050 = vmatpush1.msra.mxu0 0.0
      %1051 = vmatprep.subr.mxu0 0.0
      %1052 = vmatpush1.msra.mxu0 0.0
      %1053 = vmatprep.subr.mxu0 0.0
      %1054 = vmatpush1.msra.mxu0 0.0
      %1055 = vmatprep.subr.mxu0 0.0
      %1056 = vmatpush1.msra.mxu0 0.0
      %1057 = vmatprep.subr.mxu0 0.0
      %1058 = vmatpush1.msra.mxu0 0.0
      %1059 = vmatprep.subr.mxu0 0.0
      %1060 = vmatpush1.msra.mxu0 0.0
      %1061 = vmatprep.subr.mxu0 0.0
      %1062 = vmatpush1.msra.mxu0 0.0
      %1063 = vmatprep.subr.mxu0 0.0
      %1064 = vmatpush1.msra.mxu0 0.0
      %1065 = vmatprep.subr.mxu0 0.0
      %1066 = vmatpush1.msra.mxu0 0.0
      %1067 = vmatprep.subr.mxu0 0.0
      %1068 = vmatpush1.msra.mxu0 0.0
      %1069 = vmatprep.subr.mxu0 0.0
      %1070 = vmatpush1.msra.mxu0 0.0
      %1071 = vmatprep.subr.mxu0 0.0
      %1072 = vmatpush1.msra.mxu0 0.0
      %1073 = vmatprep.subr.mxu0 0.0
      %1074 = vmatpush1.msra.mxu0 0.0
      %1075 = vmatprep.subr.mxu0 0.0
      %1076 = vmatpush1.msra.mxu0 0.0
      %1077 = vmatprep.subr.mxu0 0.0
      %1078 = vmatpush1.msra.mxu0 0.0
      %1079 = vmatprep.subr.mxu0 0.0
      %1080 = vmatpush1.msra.mxu0 0.0
      %1081 = vmatprep.mubr.f32.mxu0 0.0
      %1082 = vmatmul.mubr.f32.gmra.mrb[0].mxu0 %v1011
      %v1083 = vpop.f32.mrb[0].mxu0
      %v1084 = vadd.f32 0.0, %v1083
      %v1085 = vpop.f32.mrb[0].mxu0
      %1086 = vmatprep.mubr.f32.mxu0 0.0
      %1087 = vmatmul.mubr.f32.gmra.mrb[0].mxu0 %v1013
      %v1088 = vpop.f32.mrb[0].mxu0
      %v1089 = vadd.f32 0.0, %v1088
      %v1090 = vpop.f32.mrb[0].mxu0
      %1091 = vmatprep.mubr.f32.mxu0 0.0
      %1092 = vmatmul.mubr.f32.gmra.mrb[0].mxu0 %v1015
      %v1093 = vpop.f32.mrb[0].mxu0
      %v1094 = vadd.f32 0.0, %v1093
      %v1095 = vpop.f32.mrb[0].mxu0
      %1096 = vdwg.mxu0
      %v1097 = vsel %vm1010, %v996, 0
      %v1099 = vsel %vm1010, %v997, 0
      %v1101 = vsel %vm1010, %v998, 0
      %1103 = vmatprep.subr.mxu0 0.0
      %1104 = vmatpush1.msra.mxu0 %v999
      %1105 = vmatprep.subr.mxu0 0.0
      %1106 = vmatpush1.msra.mxu0 0.0
      %1107 = vmatprep.subr.mxu0 0.0
      %1108 = vmatpush1.msra.mxu0 0.0
      %1109 = vmatprep.subr.mxu0 0.0
      %1110 = vmatpush1.msra.mxu0 0.0
      %1111 = vmatprep.subr.mxu0 0.0
      %1112 = vmatpush1.msra.mxu0 0.0
      %1113 = vmatprep.subr.mxu0 0.0
      %1114 = vmatpush1.msra.mxu0 0.0
      %1115 = vmatprep.subr.mxu0 0.0
      %1116 = vmatpush1.msra.mxu0 0.0
      %1117 = vmatprep.subr.mxu0 0.0
      %1118 = vmatpush1.msra.mxu0 0.0
      %1119 = vmatprep.subr.mxu0 0.0
      %1120 = vmatpush1.msra.mxu0 0.0
      %1121 = vmatprep.subr.mxu0 0.0
      %1122 = vmatpush1.msra.mxu0 0.0
      %1123 = vmatprep.subr.mxu0 0.0
      %1124 = vmatpush1.msra.mxu0 0.0
      %1125 = vmatprep.subr.mxu0 0.0
      %1126 = vmatpush1.msra.mxu0 0.0
      %1127 = vmatprep.subr.mxu0 0.0
      %1128 = vmatpush1.msra.mxu0 0.0
      %1129 = vmatprep.subr.mxu0 0.0
      %1130 = vmatpush1.msra.mxu0 0.0
      %1131 = vmatprep.subr.mxu0 0.0
      %1132 = vmatpush1.msra.mxu0 0.0
      %1133 = vmatprep.subr.mxu0 0.0
      %1134 = vmatpush1.msra.mxu0 0.0
      %1135 = vmatprep.subr.mxu0 0.0
      %1136 = vmatpush1.msra.mxu0 0.0
      %1137 = vmatprep.subr.mxu0 0.0
      %1138 = vmatpush1.msra.mxu0 0.0
      %1139 = vmatprep.subr.mxu0 0.0
      %1140 = vmatpush1.msra.mxu0 0.0
      %1141 = vmatprep.subr.mxu0 0.0
      %1142 = vmatpush1.msra.mxu0 0.0
      %1143 = vmatprep.subr.mxu0 0.0
      %1144 = vmatpush1.msra.mxu0 0.0
      %1145 = vmatprep.subr.mxu0 0.0
      %1146 = vmatpush1.msra.mxu0 0.0
      %1147 = vmatprep.subr.mxu0 0.0
      %1148 = vmatpush1.msra.mxu0 0.0
      %1149 = vmatprep.subr.mxu0 0.0
      %1150 = vmatpush1.msra.mxu0 0.0
      %1151 = vmatprep.subr.mxu0 0.0
      %1152 = vmatpush1.msra.mxu0 0.0
      %1153 = vmatprep.subr.mxu0 0.0
      %1154 = vmatpush1.msra.mxu0 0.0
      %1155 = vmatprep.subr.mxu0 0.0
      %1156 = vmatpush1.msra.mxu0 0.0
      %1157 = vmatprep.subr.mxu0 0.0
      %1158 = vmatpush1.msra.mxu0 0.0
      %1159 = vmatprep.subr.mxu0 0.0
      %1160 = vmatpush1.msra.mxu0 0.0
      %1161 = vmatprep.subr.mxu0 0.0
      %1162 = vmatpush1.msra.mxu0 0.0
      %1163 = vmatprep.subr.mxu0 0.0
      %1164 = vmatpush1.msra.mxu0 0.0
      %1165 = vmatprep.subr.mxu0 0.0
      %1166 = vmatpush1.msra.mxu0 0.0
      %1167 = vmatprep.mubr.f32.mxu0 0.0
      %1168 = vmatmul.mubr.f32.gmra.mrb[0].mxu0 %v1097
      %v1169 = vpop.f32.mrb[0].mxu0
      %v1170 = vadd.f32 %v1084, %v1169
      %v1171 = vpop.f32.mrb[0].mxu0
      %1172 = vmatprep.mubr.f32.mxu0 0.0
      %1173 = vmatmul.mubr.f32.gmra.mrb[0].mxu0 %v1099
      %v1174 = vpop.f32.mrb[0].mxu0
      %v1175 = vadd.f32 %v1089, %v1174
      %v1176 = vpop.f32.mrb[0].mxu0
      %1177 = vmatprep.mubr.f32.mxu0 0.0
      %1178 = vmatmul.mubr.f32.gmra.mrb[0].mxu0 %v1101
      %v1179 = vpop.f32.mrb[0].mxu0
      %v1180 = vadd.f32 %v1094, %v1179
      %v1181 = vpop.f32.mrb[0].mxu0
      %1182 = vdwg.mxu0
      %s1183 = scalar_lea.vmem %s6, 16
      %v1184 = vld [vmem:[%s1183] sm:$0xff]
      %v1185 = vrot.slane %v996, 2
      %v1186 = vrot.slane %v997, 2
      %v1187 = vsel %vm855, %v1185, %v1186
      %v1188 = vrot.slane %v998, 2
      %v1189 = vsel %vm855, %v1186, %v1188
      %v1190 = vsel %vm1010, %v1187, 0
      %v1192 = vsel %vm1010, %v1189, 0
      %v1194 = vsel %vm1010, %v1188, 0
      %1196 = vmatprep.subr.mxu0 0.0
      %1197 = vmatpush1.msra.mxu0 %v1184
      %1198 = vmatprep.subr.mxu0 0.0
      %1199 = vmatpush1.msra.mxu0 0.0
      %1200 = vmatprep.subr.mxu0 0.0
      %1201 = vmatpush1.msra.mxu0 0.0
      %1202 = vmatprep.subr.mxu0 0.0
      %1203 = vmatpush1.msra.mxu0 0.0
      %1204 = vmatprep.subr.mxu0 0.0
      %1205 = vmatpush1.msra.mxu0 0.0
      %1206 = vmatprep.subr.mxu0 0.0
      %1207 = vmatpush1.msra.mxu0 0.0
      %1208 = vmatprep.subr.mxu0 0.0
      %1209 = vmatpush1.msra.mxu0 0.0
      %1210 = vmatprep.subr.mxu0 0.0
      %1211 = vmatpush1.msra.mxu0 0.0
      %1212 = vmatprep.subr.mxu0 0.0
      %1213 = vmatpush1.msra.mxu0 0.0
      %1214 = vmatprep.subr.mxu0 0.0
      %1215 = vmatpush1.msra.mxu0 0.0
      %1216 = vmatprep.subr.mxu0 0.0
      %1217 = vmatpush1.msra.mxu0 0.0
      %1218 = vmatprep.subr.mxu0 0.0
      %1219 = vmatpush1.msra.mxu0 0.0
      %1220 = vmatprep.subr.mxu0 0.0
      %1221 = vmatpush1.msra.mxu0 0.0
      %1222 = vmatprep.subr.mxu0 0.0
      %1223 = vmatpush1.msra.mxu0 0.0
      %1224 = vmatprep.subr.mxu0 0.0
      %1225 = vmatpush1.msra.mxu0 0.0
      %1226 = vmatprep.subr.mxu0 0.0
      %1227 = vmatpush1.msra.mxu0 0.0
      %1228 = vmatprep.subr.mxu0 0.0
      %1229 = vmatpush1.msra.mxu0 0.0
      %1230 = vmatprep.subr.mxu0 0.0
      %1231 = vmatpush1.msra.mxu0 0.0
      %1232 = vmatprep.subr.mxu0 0.0
      %1233 = vmatpush1.msra.mxu0 0.0
      %1234 = vmatprep.subr.mxu0 0.0
      %1235 = vmatpush1.msra.mxu0 0.0
      %1236 = vmatprep.subr.mxu0 0.0
      %1237 = vmatpush1.msra.mxu0 0.0
      %1238 = vmatprep.subr.mxu0 0.0
      %1239 = vmatpush1.msra.mxu0 0.0
      %1240 = vmatprep.subr.mxu0 0.0
      %1241 = vmatpush1.msra.mxu0 0.0
      %1242 = vmatprep.subr.mxu0 0.0
      %1243 = vmatpush1.msra.mxu0 0.0
      %1244 = vmatprep.subr.mxu0 0.0
      %1245 = vmatpush1.msra.mxu0 0.0
      %1246 = vmatprep.subr.mxu0 0.0
      %1247 = vmatpush1.msra.mxu0 0.0
      %1248 = vmatprep.subr.mxu0 0.0
      %1249 = vmatpush1.msra.mxu0 0.0
      %1250 = vmatprep.subr.mxu0 0.0
      %1251 = vmatpush1.msra.mxu0 0.0
      %1252 = vmatprep.subr.mxu0 0.0
      %1253 = vmatpush1.msra.mxu0 0.0
      %1254 = vmatprep.subr.mxu0 0.0
      %1255 = vmatpush1.msra.mxu0 0.0
      %1256 = vmatprep.subr.mxu0 0.0
      %1257 = vmatpush1.msra.mxu0 0.0
      %1258 = vmatprep.subr.mxu0 0.0
      %1259 = vmatpush1.msra.mxu0 0.0
      %1260 = vmatprep.mubr.f32.mxu0 0.0
      %1261 = vmatmul.mubr.f32.gmra.mrb[0].mxu0 %v1190
      %v1262 = vpop.f32.mrb[0].mxu0
      %v1263 = vadd.f32 0.0, %v1262
      %v1264 = vpop.f32.mrb[0].mxu0
      %1265 = vmatprep.mubr.f32.mxu0 0.0
      %1266 = vmatmul.mubr.f32.gmra.mrb[0].mxu0 %v1192
      %v1267 = vpop.f32.mrb[0].mxu0
      %v1268 = vadd.f32 0.0, %v1267
      %v1269 = vpop.f32.mrb[0].mxu0
      %1270 = vmatprep.mubr.f32.mxu0 0.0
      %1271 = vmatmul.mubr.f32.gmra.mrb[0].mxu0 %v1194
      %v1272 = vpop.f32.mrb[0].mxu0
      %v1273 = vadd.f32 0.0, %v1272
      %v1274 = vpop.f32.mrb[0].mxu0
      %1275 = vdwg.mxu0
      %v1276 = vadd.f32 %v1170, %v1263
      %v1277 = vadd.f32 %v1175, %v1268
      %v1278 = vadd.f32 %v1180, %v1273
      %v1279 = vld [vmem:[%s7] sm:$0x1]
      %v1281 = vlaneseq
      %v1282 = vshrl.u32 %v1281, 7
      %v1283 = vsub.s32 0, %v1282
      %v1284 = vrot.slane %v1279, %v1283
      %v1286 = vmul.f32 %v1276, %v1284
      %v1287 = vmul.f32 %v1277, %v1284
      %v1288 = vmul.f32 %v1278, %v1284
      %v1289 = vld [vmem:[%s8] sm:$0x1]
      %v1291 = vlaneseq
      %v1292 = vshrl.u32 %v1291, 7
      %v1293 = vsub.s32 0, %v1292
      %v1294 = vrot.slane %v1289, %v1293
      %v1296 = vadd.f32 %v1286, %v1294
      %v1297 = vadd.f32 %v1287, %v1294
      %v1298 = vadd.f32 %v1288, %v1294
      %v1299 = vmax.f32 %v1296, 0.0
      %v1300 = vmax.f32 %v1297, 0.0
      %v1301 = vmax.f32 %v1298, 0.0
      %s1302 = ssub.s32 %s633, 6
      %v1303 = vstv %s1302
      %v1304 = vadd.s32 %v1303, %v636
      %v1305 = vadd.s32 %v1303, %v637
      %v1306 = vadd.s32 %v1303, %v638
      %vm1307 = vcmp.ge.s32.totalorder %v1304, 0
      %vm1308 = vcmp.ge.s32.totalorder %v1305, 0
      %vm1309 = vcmp.ge.s32.totalorder %v1306, 0
      %vm1310 = vcmp.lt.s32.totalorder %v1304, 16
      %vm1311 = vcmp.lt.s32.totalorder %v1305, 16
      %vm1312 = vcmp.lt.s32.totalorder %v1306, 16
      %vm1313 = vmand %vm1307, %vm1310
      %vm1314 = vmand %vm1308, %vm1311
      %vm1315 = vmand %vm1309, %vm1312
      %v1316 = vsel %vm1313, 1, 0
      %v1317 = vsel %vm1314, 1, 0
      %v1318 = vsel %vm1315, 1, 0
      %vm1319 = vcmp.eq.s32.totalorder %v1316, 1
      %vm1320 = vcmp.eq.s32.totalorder %v1317, 1
      %vm1321 = vcmp.eq.s32.totalorder %v1318, 1
      %v1322 = vsel %vm1319, %v1299, 0.0
      %v1323 = vsel %vm1320, %v1300, 0.0
      %v1324 = vsel %vm1321, %v1301, 0.0
      %v1325 = vld [vmem:[%s9] sm:$0xff]
      %s1326 = scalar_lea.vmem %s9, 8
      %v1327 = vld [vmem:[%s1326] sm:$0xff]
      %v1331 = vrot.slane %v1322, 1
      %v1332 = vrot.slane %v1323, 1
      %v1333 = vsel %vm667, %v1331, %v1332
      %v1334 = vrot.slane %v1324, 1
      %v1335 = vsel %vm667, %v1332, %v1334
      %v1336 = vsel %vm1010, %v1333, 0
      %v1338 = vsel %vm1010, %v1335, 0
      %v1340 = vsel %vm1010, %v1334, 0
      %1342 = vmatprep.subr.mxu0 0.0
      %1343 = vmatpush1.msra.mxu0 %v1327
      %1344 = vmatprep.subr.mxu0 0.0
      %1345 = vmatpush1.msra.mxu0 0.0
      %1346 = vmatprep.subr.mxu0 0.0
      %1347 = vmatpush1.msra.mxu0 0.0
      %1348 = vmatprep.subr.mxu0 0.0
      %1349 = vmatpush1.msra.mxu0 0.0
      %1350 = vmatprep.subr.mxu0 0.0
      %1351 = vmatpush1.msra.mxu0 0.0
      %1352 = vmatprep.subr.mxu0 0.0
      %1353 = vmatpush1.msra.mxu0 0.0
      %1354 = vmatprep.subr.mxu0 0.0
      %1355 = vmatpush1.msra.mxu0 0.0
      %1356 = vmatprep.subr.mxu0 0.0
      %1357 = vmatpush1.msra.mxu0 0.0
      %1358 = vmatprep.subr.mxu0 0.0
      %1359 = vmatpush1.msra.mxu0 0.0
      %1360 = vmatprep.subr.mxu0 0.0
      %1361 = vmatpush1.msra.mxu0 0.0
      %1362 = vmatprep.subr.mxu0 0.0
      %1363 = vmatpush1.msra.mxu0 0.0
      %1364 = vmatprep.subr.mxu0 0.0
      %1365 = vmatpush1.msra.mxu0 0.0
      %1366 = vmatprep.subr.mxu0 0.0
      %1367 = vmatpush1.msra.mxu0 0.0
      %1368 = vmatprep.subr.mxu0 0.0
      %1369 = vmatpush1.msra.mxu0 0.0
      %1370 = vmatprep.subr.mxu0 0.0
      %1371 = vmatpush1.msra.mxu0 0.0
      %1372 = vmatprep.subr.mxu0 0.0
      %1373 = vmatpush1.msra.mxu0 0.0
      %1374 = vmatprep.subr.mxu0 0.0
      %1375 = vmatpush1.msra.mxu0 0.0
      %1376 = vmatprep.subr.mxu0 0.0
      %1377 = vmatpush1.msra.mxu0 0.0
      %1378 = vmatprep.subr.mxu0 0.0
      %1379 = vmatpush1.msra.mxu0 0.0
      %1380 = vmatprep.subr.mxu0 0.0
      %1381 = vmatpush1.msra.mxu0 0.0
      %1382 = vmatprep.subr.mxu0 0.0
      %1383 = vmatpush1.msra.mxu0 0.0
      %1384 = vmatprep.subr.mxu0 0.0
      %1385 = vmatpush1.msra.mxu0 0.0
      %1386 = vmatprep.subr.mxu0 0.0
      %1387 = vmatpush1.msra.mxu0 0.0
      %1388 = vmatprep.subr.mxu0 0.0
      %1389 = vmatpush1.msra.mxu0 0.0
      %1390 = vmatprep.subr.mxu0 0.0
      %1391 = vmatpush1.msra.mxu0 0.0
      %1392 = vmatprep.subr.mxu0 0.0
      %1393 = vmatpush1.msra.mxu0 0.0
      %1394 = vmatprep.subr.mxu0 0.0
      %1395 = vmatpush1.msra.mxu0 0.0
      %1396 = vmatprep.subr.mxu0 0.0
      %1397 = vmatpush1.msra.mxu0 0.0
      %1398 = vmatprep.subr.mxu0 0.0
      %1399 = vmatpush1.msra.mxu0 0.0
      %1400 = vmatprep.subr.mxu0 0.0
      %1401 = vmatpush1.msra.mxu0 0.0
      %1402 = vmatprep.subr.mxu0 0.0
      %1403 = vmatpush1.msra.mxu0 0.0
      %1404 = vmatprep.subr.mxu0 0.0
      %1405 = vmatpush1.msra.mxu0 0.0
      %1406 = vmatprep.mubr.f32.mxu0 0.0
      %1407 = vmatmul.mubr.f32.gmra.mrb[0].mxu0 %v1336
      %v1408 = vpop.f32.mrb[0].mxu0
      %v1409 = vadd.f32 0.0, %v1408
      %v1410 = vpop.f32.mrb[0].mxu0
      %1411 = vmatprep.mubr.f32.mxu0 0.0
      %1412 = vmatmul.mubr.f32.gmra.mrb[0].mxu0 %v1338
      %v1413 = vpop.f32.mrb[0].mxu0
      %v1414 = vadd.f32 0.0, %v1413
      %v1415 = vpop.f32.mrb[0].mxu0
      %1416 = vmatprep.mubr.f32.mxu0 0.0
      %1417 = vmatmul.mubr.f32.gmra.mrb[0].mxu0 %v1340
      %v1418 = vpop.f32.mrb[0].mxu0
      %v1419 = vpop.f32.mrb[0].mxu0
      %1420 = vdwg.mxu0
      %v1421 = vsel %vm1010, %v1322, 0
      %v1423 = vsel %vm1010, %v1323, 0
      %v1425 = vsel %vm1010, %v1324, 0
      %1427 = vmatprep.subr.mxu0 0.0
      %1428 = vmatpush1.msra.mxu0 %v1325
      %1429 = vmatprep.subr.mxu0 0.0
      %1430 = vmatpush1.msra.mxu0 0.0
      %1431 = vmatprep.subr.mxu0 0.0
      %1432 = vmatpush1.msra.mxu0 0.0
      %1433 = vmatprep.subr.mxu0 0.0
      %1434 = vmatpush1.msra.mxu0 0.0
      %1435 = vmatprep.subr.mxu0 0.0
      %1436 = vmatpush1.msra.mxu0 0.0
      %1437 = vmatprep.subr.mxu0 0.0
      %1438 = vmatpush1.msra.mxu0 0.0
      %1439 = vmatprep.subr.mxu0 0.0
      %1440 = vmatpush1.msra.mxu0 0.0
      %1441 = vmatprep.subr.mxu0 0.0
      %1442 = vmatpush1.msra.mxu0 0.0
      %1443 = vmatprep.subr.mxu0 0.0
      %1444 = vmatpush1.msra.mxu0 0.0
      %1445 = vmatprep.subr.mxu0 0.0
      %1446 = vmatpush1.msra.mxu0 0.0
      %1447 = vmatprep.subr.mxu0 0.0
      %1448 = vmatpush1.msra.mxu0 0.0
      %1449 = vmatprep.subr.mxu0 0.0
      %1450 = vmatpush1.msra.mxu0 0.0
      %1451 = vmatprep.subr.mxu0 0.0
      %1452 = vmatpush1.msra.mxu0 0.0
      %1453 = vmatprep.subr.mxu0 0.0
      %1454 = vmatpush1.msra.mxu0 0.0
      %1455 = vmatprep.subr.mxu0 0.0
      %1456 = vmatpush1.msra.mxu0 0.0
      %1457 = vmatprep.subr.mxu0 0.0
      %1458 = vmatpush1.msra.mxu0 0.0
      %1459 = vmatprep.subr.mxu0 0.0
      %1460 = vmatpush1.msra.mxu0 0.0
      %1461 = vmatprep.subr.mxu0 0.0
      %1462 = vmatpush1.msra.mxu0 0.0
      %1463 = vmatprep.subr.mxu0 0.0
      %1464 = vmatpush1.msra.mxu0 0.0
      %1465 = vmatprep.subr.mxu0 0.0
      %1466 = vmatpush1.msra.mxu0 0.0
      %1467 = vmatprep.subr.mxu0 0.0
      %1468 = vmatpush1.msra.mxu0 0.0
      %1469 = vmatprep.subr.mxu0 0.0
      %1470 = vmatpush1.msra.mxu0 0.0
      %1471 = vmatprep.subr.mxu0 0.0
      %1472 = vmatpush1.msra.mxu0 0.0
      %1473 = vmatprep.subr.mxu0 0.0
      %1474 = vmatpush1.msra.mxu0 0.0
      %1475 = vmatprep.subr.mxu0 0.0
      %1476 = vmatpush1.msra.mxu0 0.0
      %1477 = vmatprep.subr.mxu0 0.0
      %1478 = vmatpush1.msra.mxu0 0.0
      %1479 = vmatprep.subr.mxu0 0.0
      %1480 = vmatpush1.msra.mxu0 0.0
      %1481 = vmatprep.subr.mxu0 0.0
      %1482 = vmatpush1.msra.mxu0 0.0
      %1483 = vmatprep.subr.mxu0 0.0
      %1484 = vmatpush1.msra.mxu0 0.0
      %1485 = vmatprep.subr.mxu0 0.0
      %1486 = vmatpush1.msra.mxu0 0.0
      %1487 = vmatprep.subr.mxu0 0.0
      %1488 = vmatpush1.msra.mxu0 0.0
      %1489 = vmatprep.subr.mxu0 0.0
      %1490 = vmatpush1.msra.mxu0 0.0
      %1491 = vmatprep.mubr.f32.mxu0 0.0
      %1492 = vmatmul.mubr.f32.gmra.mrb[0].mxu0 %v1421
      %v1493 = vpop.f32.mrb[0].mxu0
      %v1494 = vadd.f32 %v1409, %v1493
      %v1495 = vpop.f32.mrb[0].mxu0
      %1496 = vmatprep.mubr.f32.mxu0 0.0
      %1497 = vmatmul.mubr.f32.gmra.mrb[0].mxu0 %v1423
      %v1498 = vpop.f32.mrb[0].mxu0
      %v1499 = vadd.f32 %v1414, %v1498
      %v1500 = vpop.f32.mrb[0].mxu0
      %1501 = vmatprep.mubr.f32.mxu0 0.0
      %1502 = vmatmul.mubr.f32.gmra.mrb[0].mxu0 %v1425
      %v1503 = vpop.f32.mrb[0].mxu0
      %v1504 = vpop.f32.mrb[0].mxu0
      %1505 = vdwg.mxu0
      %s1506 = scalar_lea.vmem %s9, 16
      %v1507 = vld [vmem:[%s1506] sm:$0xff]
      %v1508 = vrot.slane %v1322, 2
      %v1509 = vrot.slane %v1323, 2
      %v1510 = vsel %vm855, %v1508, %v1509
      %v1511 = vrot.slane %v1324, 2
      %v1512 = vsel %vm855, %v1509, %v1511
      %v1513 = vsel %vm1010, %v1510, 0
      %v1515 = vsel %vm1010, %v1512, 0
      %v1517 = vsel %vm1010, %v1511, 0
      %1519 = vmatprep.subr.mxu0 0.0
      %1520 = vmatpush1.msra.mxu0 %v1507
      %1521 = vmatprep.subr.mxu0 0.0
      %1522 = vmatpush1.msra.mxu0 0.0
      %1523 = vmatprep.subr.mxu0 0.0
      %1524 = vmatpush1.msra.mxu0 0.0
      %1525 = vmatprep.subr.mxu0 0.0
      %1526 = vmatpush1.msra.mxu0 0.0
      %1527 = vmatprep.subr.mxu0 0.0
      %1528 = vmatpush1.msra.mxu0 0.0
      %1529 = vmatprep.subr.mxu0 0.0
      %1530 = vmatpush1.msra.mxu0 0.0
      %1531 = vmatprep.subr.mxu0 0.0
      %1532 = vmatpush1.msra.mxu0 0.0
      %1533 = vmatprep.subr.mxu0 0.0
      %1534 = vmatpush1.msra.mxu0 0.0
      %1535 = vmatprep.subr.mxu0 0.0
      %1536 = vmatpush1.msra.mxu0 0.0
      %1537 = vmatprep.subr.mxu0 0.0
      %1538 = vmatpush1.msra.mxu0 0.0
      %1539 = vmatprep.subr.mxu0 0.0
      %1540 = vmatpush1.msra.mxu0 0.0
      %1541 = vmatprep.subr.mxu0 0.0
      %1542 = vmatpush1.msra.mxu0 0.0
      %1543 = vmatprep.subr.mxu0 0.0
      %1544 = vmatpush1.msra.mxu0 0.0
      %1545 = vmatprep.subr.mxu0 0.0
      %1546 = vmatpush1.msra.mxu0 0.0
      %1547 = vmatprep.subr.mxu0 0.0
      %1548 = vmatpush1.msra.mxu0 0.0
      %1549 = vmatprep.subr.mxu0 0.0
      %1550 = vmatpush1.msra.mxu0 0.0
      %1551 = vmatprep.subr.mxu0 0.0
      %1552 = vmatpush1.msra.mxu0 0.0
      %1553 = vmatprep.subr.mxu0 0.0
      %1554 = vmatpush1.msra.mxu0 0.0
      %1555 = vmatprep.subr.mxu0 0.0
      %1556 = vmatpush1.msra.mxu0 0.0
      %1557 = vmatprep.subr.mxu0 0.0
      %1558 = vmatpush1.msra.mxu0 0.0
      %1559 = vmatprep.subr.mxu0 0.0
      %1560 = vmatpush1.msra.mxu0 0.0
      %1561 = vmatprep.subr.mxu0 0.0
      %1562 = vmatpush1.msra.mxu0 0.0
      %1563 = vmatprep.subr.mxu0 0.0
      %1564 = vmatpush1.msra.mxu0 0.0
      %1565 = vmatprep.subr.mxu0 0.0
      %1566 = vmatpush1.msra.mxu0 0.0
      %1567 = vmatprep.subr.mxu0 0.0
      %1568 = vmatpush1.msra.mxu0 0.0
      %1569 = vmatprep.subr.mxu0 0.0
      %1570 = vmatpush1.msra.mxu0 0.0
      %1571 = vmatprep.subr.mxu0 0.0
      %1572 = vmatpush1.msra.mxu0 0.0
      %1573 = vmatprep.subr.mxu0 0.0
      %1574 = vmatpush1.msra.mxu0 0.0
      %1575 = vmatprep.subr.mxu0 0.0
      %1576 = vmatpush1.msra.mxu0 0.0
      %1577 = vmatprep.subr.mxu0 0.0
      %1578 = vmatpush1.msra.mxu0 0.0
      %1579 = vmatprep.subr.mxu0 0.0
      %1580 = vmatpush1.msra.mxu0 0.0
      %1581 = vmatprep.subr.mxu0 0.0
      %1582 = vmatpush1.msra.mxu0 0.0
      %1583 = vmatprep.mubr.f32.mxu0 0.0
      %1584 = vmatmul.mubr.f32.gmra.mrb[0].mxu0 %v1513
      %v1585 = vpop.f32.mrb[0].mxu0
      %v1586 = vadd.f32 0.0, %v1585
      %v1587 = vpop.f32.mrb[0].mxu0
      %1588 = vmatprep.mubr.f32.mxu0 0.0
      %1589 = vmatmul.mubr.f32.gmra.mrb[0].mxu0 %v1515
      %v1590 = vpop.f32.mrb[0].mxu0
      %v1591 = vadd.f32 0.0, %v1590
      %v1592 = vpop.f32.mrb[0].mxu0
      %1593 = vmatprep.mubr.f32.mxu0 0.0
      %1594 = vmatmul.mubr.f32.gmra.mrb[0].mxu0 %v1517
      %v1595 = vpop.f32.mrb[0].mxu0
      %v1596 = vpop.f32.mrb[0].mxu0
      %1597 = vdwg.mxu0
      %v1598 = vadd.f32 %v1494, %v1586
      %v1599 = vadd.f32 %v1499, %v1591
      %v1600 = vld [vmem:[%s10] sm:$0x1]
      %v1602 = vlaneseq
      %v1603 = vshrl.u32 %v1602, 7
      %v1604 = vsub.s32 0, %v1603
      %v1605 = vrot.slane %v1600, %v1604
      %v1607 = vmul.f32 %v1598, %v1605
      %v1608 = vmul.f32 %v1599, %v1605
      %v1609 = vld [vmem:[%s11] sm:$0x1]
      %v1611 = vlaneseq
      %v1612 = vshrl.u32 %v1611, 7
      %v1613 = vsub.s32 0, %v1612
      %v1614 = vrot.slane %v1609, %v1613
      %v1616 = vadd.f32 %v1607, %v1614
      %v1617 = vadd.f32 %v1608, %v1614
      %v1618 = vld [vmem:[%s12] sm:$0xf]
      %v1620 = vsel %vm673, %v631, 0
      %v1623 = vsel %vm680, %v1618, 0
      %1625 = vmatprep.subr.mxu0 0.0
      %1626 = vmatpush1.msra.mxu0 %v1623
      %1627 = vmatprep.subr.mxu0 0.0
      %1628 = vmatpush1.msra.mxu0 0.0
      %1629 = vmatprep.subr.mxu0 0.0
      %1630 = vmatpush1.msra.mxu0 0.0
      %1631 = vmatprep.subr.mxu0 0.0
      %1632 = vmatpush1.msra.mxu0 0.0
      %1633 = vmatprep.subr.mxu0 0.0
      %1634 = vmatpush1.msra.mxu0 0.0
      %1635 = vmatprep.subr.mxu0 0.0
      %1636 = vmatpush1.msra.mxu0 0.0
      %1637 = vmatprep.subr.mxu0 0.0
      %1638 = vmatpush1.msra.mxu0 0.0
      %1639 = vmatprep.subr.mxu0 0.0
      %1640 = vmatpush1.msra.mxu0 0.0
      %1641 = vmatprep.subr.mxu0 0.0
      %1642 = vmatpush1.msra.mxu0 0.0
      %1643 = vmatprep.subr.mxu0 0.0
      %1644 = vmatpush1.msra.mxu0 0.0
      %1645 = vmatprep.subr.mxu0 0.0
      %1646 = vmatpush1.msra.mxu0 0.0
      %1647 = vmatprep.subr.mxu0 0.0
      %1648 = vmatpush1.msra.mxu0 0.0
      %1649 = vmatprep.subr.mxu0 0.0
      %1650 = vmatpush1.msra.mxu0 0.0
      %1651 = vmatprep.subr.mxu0 0.0
      %1652 = vmatpush1.msra.mxu0 0.0
      %1653 = vmatprep.subr.mxu0 0.0
      %1654 = vmatpush1.msra.mxu0 0.0
      %1655 = vmatprep.subr.mxu0 0.0
      %1656 = vmatpush1.msra.mxu0 0.0
      %1657 = vmatprep.subr.mxu0 0.0
      %1658 = vmatpush1.msra.mxu0 0.0
      %1659 = vmatprep.subr.mxu0 0.0
      %1660 = vmatpush1.msra.mxu0 0.0
      %1661 = vmatprep.subr.mxu0 0.0
      %1662 = vmatpush1.msra.mxu0 0.0
      %1663 = vmatprep.subr.mxu0 0.0
      %1664 = vmatpush1.msra.mxu0 0.0
      %1665 = vmatprep.subr.mxu0 0.0
      %1666 = vmatpush1.msra.mxu0 0.0
      %1667 = vmatprep.subr.mxu0 0.0
      %1668 = vmatpush1.msra.mxu0 0.0
      %1669 = vmatprep.subr.mxu0 0.0
      %1670 = vmatpush1.msra.mxu0 0.0
      %1671 = vmatprep.subr.mxu0 0.0
      %1672 = vmatpush1.msra.mxu0 0.0
      %1673 = vmatprep.subr.mxu0 0.0
      %1674 = vmatpush1.msra.mxu0 0.0
      %1675 = vmatprep.subr.mxu0 0.0
      %1676 = vmatpush1.msra.mxu0 0.0
      %1677 = vmatprep.subr.mxu0 0.0
      %1678 = vmatpush1.msra.mxu0 0.0
      %1679 = vmatprep.subr.mxu0 0.0
      %1680 = vmatpush1.msra.mxu0 0.0
      %1681 = vmatprep.subr.mxu0 0.0
      %1682 = vmatpush1.msra.mxu0 0.0
      %1683 = vmatprep.subr.mxu0 0.0
      %1684 = vmatpush1.msra.mxu0 0.0
      %1685 = vmatprep.subr.mxu0 0.0
      %1686 = vmatpush1.msra.mxu0 0.0
      %1687 = vmatprep.subr.mxu0 0.0
      %1688 = vmatpush1.msra.mxu0 0.0
      %1689 = vmatprep.mubr.f32.mxu0 0.0
      %1690 = vmatmul.mubr.f32.gmra.mrb[0].mxu0 %v1620
      %v1691 = vpop.f32.mrb[0].mxu0
      %v1692 = vadd.f32 0.0, %v1691
      %v1693 = vpop.f32.mrb[0].mxu0
      %1694 = vdwg.mxu0
      %v1695 = vld [vmem:[%s13] sm:$0x1]
      %v1697 = vlaneseq
      %v1698 = vshrl.u32 %v1697, 7
      %v1699 = vsub.s32 0, %v1698
      %v1700 = vrot.slane %v1695, %v1699
      %v1702 = vmul.f32 %v1692, %v1700
      %v1703 = vld [vmem:[%s14] sm:$0x1]
      %v1705 = vlaneseq
      %v1706 = vshrl.u32 %v1705, 7
      %v1707 = vsub.s32 0, %v1706
      %v1708 = vrot.slane %v1703, %v1707
      %v1710 = vadd.f32 %v1702, %v1708
      %v1712 = vrot.slane %v1710, 3
      %v1714 = vadd.f32 %v1616, %v1712
      %v1715 = vadd.f32 %v1617, %v1712
      %v1716 = vmax.f32 %v1714, 0.0
      %v1717 = vmax.f32 %v1715, 0.0
      %vm1718 = vcmask 64517
      %1719 = vst.msk [vmem:[%s629 - $0x5] sm:$0xe0] %vm1718, %v1716
      %vm1720 = vcmask 61440
      %1721 = vst.msk [vmem:[%s629 + $0x3] sm:$0x1f] %vm1720, %v1717
      %p1722 = scmp.lt.s32.totalorder %s30, 1
      %s1723 = scalar_select %p1722, %s30, 1
      %p1724 = scmp.lt.s32.totalorder %s31, 1
      %s1725 = scalar_select %p1724, %s31, 1
      %s1726 = smul.addr %s1723, 2
      %s1727 = sadd.s32 %s1725, %s1726
      %s1728 = smul.addr %s1727, 8
      %s1729 = scalar_lea.vmem %s15, %s1728
      // Predicated region
      $region81: #{tpu_custom_call.1} parent=79 // pred_check
        %p1730 = pneg %p406
      $region82: #{tpu_custom_call.1} parent=79 // pred_check_branch
        %1732 = sbr.rel (%p1730) target = $region84
      $region83: #{tpu_custom_call.1} parent=79 // pred_region
        _
      $region84: #{tpu_custom_call.1} parent=79 // pred_fallthru
        _
    $region80: #{tpu_custom_call.1} parent=5 // pred_fallthru
      _
    %p1733 = scmp.le.s32.totalorder 2, %s21
    // Predicated region
    $region85: #{tpu_custom_call.1} parent=5 // pred_check
      %p1734 = pneg %p1733
    $region86: #{tpu_custom_call.1} parent=5 // pred_check_branch
      %1736 = sbr.rel (%p1734) target = $region88
    $region87: #{tpu_custom_call.1} parent=5 // pred_region
      %s1737 = ssub.s32 %s21, 2
      // Predicated region
      $region89: #{tpu_custom_call.1} parent=87 // pred_check
        %p1738 = pneg %p412
      $region90: #{tpu_custom_call.1} parent=87 // pred_check_branch
        %1740 = sbr.rel (%p1738) target = $region92
      $region91: #{tpu_custom_call.1} parent=87 // pred_region
        %p1741 = scmp.lt.s32.totalorder %s32, 1
        %s1742 = scalar_select %p1741, %s32, 1
        %p1743 = scmp.lt.s32.totalorder %s33, 1
        %s1744 = scalar_select %p1743, %s33, 1
        %s1745 = smul.addr %s1742, 2
        %s1746 = sadd.s32 %s1744, %s1745
        %s1747 = smul.addr %s1746, 8
        %s1748 = scalar_lea.vmem %s15, %s1747
      $region92: #{tpu_custom_call.1} parent=87 // pred_fallthru
        _
    $region88: #{tpu_custom_call.1} parent=5 // pred_fallthru
      _
  $region6: #{tpu_custom_call.1} parent=0 // loop_footer
    %s25 = sadd.s32 1, %s21
  $region7: #{tpu_custom_call.1} parent=0 // loop_footer_branch
    %20 = sbr.rel target = $region3
  $region8: #{tpu_custom_call.1} parent=0 // loop_exit
    _

</llo_original>
